<compile_context>
chip_gen: v5e
topology: v5e:2x2
jax: 0.10.0
libtpu: 0.0.40
codegen_flags: <defaults>
</compile_context>

<pallas_src>
import jax
import jax.numpy as jnp
from jax import lax
from jax.experimental import pallas as pl
from jax.experimental.pallas import tpu as pltpu


def _round_up(x, m):
    return ((x + m - 1) // m) * m


# ----------------------------------------------------------------------------- kernel

def _make_kernel(H, Tt, T_pad, nt, unroll):
    H2 = 2 * H

    def kernel(embf_ref, embb_ref, lens_ref, wih_hbm, whh_hbm,
               bih_ref, bhn_ref, wfc_ref, bfc_ref,
               out_ref,
               wih_ref, whh_ref, xproj_ref, h_ref, sem_ref):
        # NOTE: the time axis MUST remain the innermost ("arbitrary") grid axis: the GRU state
        # and the resident weight copies are carried in VMEM scratch across it and re-init at
        # tt == 0 (the start of every batch block).
        tt = pl.program_id(1)
        Bb = h_ref.shape[1]

        # ---- once per batch block: stage weights in VMEM (single-buffered) + zero the state --
        @pl.when(tt == 0)
        def _init():
            cw = pltpu.make_async_copy(wih_hbm, wih_ref, sem_ref.at[0])
            ch = pltpu.make_async_copy(whh_hbm, whh_ref, sem_ref.at[1])
            cw.start()
            ch.start()
            cw.wait()
            ch.wait()
            h_ref[...] = jnp.zeros_like(h_ref)

        # ---- chunk-level input projection (no serial dependence): one GEMM per direction for
        #      all three gates, staged in VMEM scratch. The r/z parts of b_hh were folded into
        #      b_ih at pack time, so no hidden-side bias is needed for those gates per step. ----
        wih = wih_ref[...]                                    # (2, H, 3H)
        xf = embf_ref[...].reshape(Tt * Bb, H)                # forward stream, step-major rows
        xb = embb_ref[...].reshape(Tt * Bb, H)                # time-reversed backward stream
        xproj_ref[0] = jnp.dot(xf, wih[0], preferred_element_type=jnp.float32) + bih_ref[0]
        xproj_ref[1] = jnp.dot(xb, wih[1], preferred_element_type=jnp.float32) + bih_ref[1]

        # ---- loop-invariant loads hoisted out of the recurrence ----
        whh = whh_ref[...]                                    # (2, H, 3H)
        bhn = bhn_ref[...]                                    # (2, 1, H) f32 (n-gate b_hh)
        lens = lens_ref[...].reshape(1, Bb, 1)                # (1, Bb, 1) int32
        t0 = tt * Tt

        def step(s, h):
            row = pl.multiple_of(s * Bb, Bb)
            xg = xproj_ref[:, pl.ds(row, Bb), :]              # (2, Bb, 3H) f32
            # one batched (fwd + bwd) recurrent matmul, no zero-padded K
            hp = jnp.einsum('dbh,dhk->dbk', h.astype(whh.dtype), whh,
                            preferred_element_type=jnp.float32)
            rz = jax.nn.sigmoid(xg[..., :H2] + hp[..., :H2])  # r and z in one EUP pass
            r = rz[..., :H]
            z = rz[..., H:]
            n = jnp.tanh(xg[..., H2:] + r * (hp[..., H2:] + bhn))
            h_new = (1.0 - z) * n + z * h                     # (2, Bb, H) f32
            # pack_padded_sequence semantics: freeze h outside each sequence's valid range
            t_f = t0 + s
            valid_f = t_f < lens                              # (1, Bb, 1)
            valid_b = (T_pad - 1 - t_f) < lens
            valid = jnp.concatenate([valid_f, valid_b], axis=0)
            return jnp.where(valid, h_new, h)

        h_ref[...] = lax.fori_loop(0, Tt, step, h_ref[...], unroll=unroll)

        # ---- classifier: cat([h_bwd, h_fwd]) @ W_fc.T + b, lane-dense (O_pad) output ----
        @pl.when(tt == nt - 1)
        def _finalize():
            h = h_ref[...]
            wfc = wfc_ref[...]                                # (2, H, O_pad)
            logits = (jnp.dot(h[0].astype(wfc.dtype), wfc[0],
                              preferred_element_type=jnp.float32)
                      + jnp.dot(h[1].astype(wfc.dtype), wfc[1],
                                preferred_element_type=jnp.float32)
                      + bfc_ref[...])
            out_ref[...] = logits.astype(out_ref.dtype)

    return kernel


# ----------------------------------------------------------------------------- wrapper

def rnn_classifier_forward(packed, inputs, seq_lengths, *, batch_block=128, time_block=64):
    """inputs: (B, T) int32 token ids; seq_lengths: (B,) int32 valid lengths (sorted desc).

    batch_block: target batch tile (fills the MXU M dim; use 256 on v6e/v7x if B allows).
    time_block:  target time chunk; shrunk automatically to fit the device VMEM budget.
    """
    B, T = inputs.shape
    H = packed['h_pad']
    O = packed['output_size']
    O_pad = packed['o_pad']
    edt = packed['embedding'].dtype
    wdt = packed['wih'].dtype
    esz = packed['embedding'].dtype.itemsize
    wsz = packed['wih'].dtype.itemsize

    # ---- batch tiling: sublane multiples (16 for bf16 packing); keep >= 2 batch blocks when
    #      the batch is large enough so both v7x TensorCores get work on the "parallel" axis.
    bmult = 16 if edt == jnp.bfloat16 else 8
    B_ceil = _round_up(B, bmult)
    Bb = max(bmult, (min(batch_block, B_ceil) // bmult) * bmult)
    if B_ceil > Bb:
        B_pad = _round_up(B_ceil, Bb)
    elif B_ceil >= 2 * bmult:
        Bb = _round_up(B_ceil // 2, bmult)        # split in two for megacore
        B_pad = 2 * Bb
    else:
        Bb = B_pad = B_ceil
    nb = B_pad // Bb

    # ---- time tiling: biggest chunk that fits an explicit per-generation VMEM budget.
    try:
        vmem_cap = int(pltpu.get_tpu_info().vmem_capacity_bytes)   # 128 MiB v5e/v6e, 64 MiB v7x
    except Exception:
        vmem_cap = 64 * 1024 * 1024

    def vmem_bytes(tt):
        emb = 2 * 2 * tt * Bb * H * esz                 # fwd + reversed streams, double-buffered
        xproj = 2 * tt * Bb * 3 * H * 4                 # f32 scratch (single)
        w_rec = 2 * (2 * H * 3 * H * wsz)               # resident W_ih + W_hh (single copies)
        wfc = 2 * 2 * H * O_pad * wsz                   # auto-pipelined (double-buffered)
        small = 2 * ((2 * 3 * H + 2 * H + O_pad) * 4 + Bb * 4 + Bb * O_pad * 4)
        state = 2 * Bb * H * 4
        return emb + xproj + w_rec + wfc + small + state

    budget = int(vmem_cap * 0.70)
    Tt = max(1, min(time_block, T))
    while Tt > 1 and vmem_bytes(Tt) > budget:
        Tt = (Tt + 1) // 2
    T_pad = _round_up(T, Tt)
    nt = T_pad // Tt
    vmem_limit = int(min(vmem_cap * 0.85, max(vmem_bytes(Tt) + (16 << 20), 32 << 20)))
    unroll = min(4, Tt)

    # ---- glue: embedding gather, padding, and the time-reversed stream for the bwd direction.
    # TODO(synk): the nn.Embedding gather stays an XLA op (data-dependent HBM gather).
    emb = jnp.take(packed['embedding'], inputs.T, axis=0)            # (T, B, H)
    emb = jnp.pad(emb, ((0, T_pad - T), (0, B_pad - B), (0, 0)))
    emb_rev = emb[::-1]                                              # one-time XLA reshuffle
    lens = jnp.pad(seq_lengths.astype(jnp.int32), (0, B_pad - B)).reshape(B_pad, 1)

    def const(shape):
        return pl.BlockSpec(shape, lambda b, t: (0,) * len(shape))

    out_padded = pl.pallas_call(
        _make_kernel(H=H, Tt=Tt, T_pad=T_pad, nt=nt, unroll=unroll),
        out_shape=jax.ShapeDtypeStruct((B_pad, O_pad), jnp.float32),
        grid=(nb, nt),                               # time MUST stay innermost (state carry)
        in_specs=[
            pl.BlockSpec((Tt, Bb, H), lambda b, t: (t, b, 0)),       # forward emb chunk
            pl.BlockSpec((Tt, Bb, H), lambda b, t: (t, b, 0)),       # reversed emb chunk
            pl.BlockSpec((Bb, 1), lambda b, t: (b, 0)),              # lengths (int32)
            pl.BlockSpec(memory_space=pl.ANY),                       # W_ih (HBM, copied once)
            pl.BlockSpec(memory_space=pl.ANY),                       # W_hh (HBM, copied once)
            const((2, 1, 3 * H)),                                    # b_ih (+ folded r/z b_hh)
            const((2, 1, H)),                                        # b_hh (n gate only)
            const((2, H, O_pad)),                                    # W_fc (lane padded)
            const((1, O_pad)),                                       # b_fc
        ],
        out_specs=pl.BlockSpec((Bb, O_pad), lambda b, t: (b, 0)),
        scratch_shapes=[
            pltpu.VMEM((2, H, 3 * H), wdt),                          # resident W_ih
            pltpu.VMEM((2, H, 3 * H), wdt),                          # resident W_hh
            pltpu.VMEM((2, Tt * Bb, 3 * H), jnp.float32),            # chunk input projection
            pltpu.VMEM((2, Bb, H), jnp.float32),                     # carried GRU state [f; b]
            pltpu.SemaphoreType.DMA((2,)),
        ],
        compiler_params=pltpu.CompilerParams(
            # TODO(synk): on v7x consider pltpu.CORE_PARALLEL on the batch axis; on v5e/v6e a
            # fully VMEM-resident embedding path (nt == 1) would halve embedding HBM traffic.
            dimension_semantics=("parallel", "arbitrary"),
            vmem_limit_bytes=vmem_limit),
    )(emb, emb_rev, lens,
      packed['wih'], packed['whh'], packed['bih'], packed['bhn'],
      packed['wfc'], packed['bfc'])

    return out_padded[:B, :O]


# ----------------------------------------------------------------------------- params

def init_params(key, input_size, hidden_size, output_size):
    """Raw PyTorch-layout parameters (W_ih/W_hh are (3H, H) with gate rows [r; z; n])."""
    H, O = hidden_size, output_size
    bound = 1.0 / (H ** 0.5)
    keys = jax.random.split(key, 11)

    def u(k, shape, b):
        return jax.random.uniform(k, shape, jnp.float32, -b, b)

    params = dict(hidden_size=H, output_size=O,
                  embedding=jax.random.normal(keys[0], (input_size, H), jnp.float32))
    for d, name in enumerate(['f', 'b']):
        base = 1 + d * 4
        params[f'w_ih_{name}'] = u(keys[base + 0], (3 * H, H), bound)
        params[f'w_hh_{name}'] = u(keys[base + 1], (3 * H, H), bound)
        params[f'b_ih_{name}'] = u(keys[base + 2], (3 * H,), bound)
        params[f'b_hh_{name}'] = u(keys[base + 3], (3 * H,), bound)
    kb = 1.0 / ((2 * H) ** 0.5)
    params['w_fc'] = u(keys[9], (O, 2 * H), kb)
    params['b_fc'] = u(keys[10], (O,), kb)
    return params


def pack_params(params, compute_dtype=jnp.bfloat16, o_pad=128, h_multiple=128):
    """Pack raw PyTorch-layout params into the stacked, lane-friendly kernel layouts.

    * H is zero-padded to a multiple of `h_multiple` so the per-direction gate tiles (.., 3H)
      and the r/z/n slice boundaries are lane (128) aligned; padded hidden units stay exactly
      zero through the recurrence and contribute nothing to the classifier.
    * wih/whh: (2, H, 3H), dim0 = [forward, backward], gate-column order [r | z | n].
    * The r/z parts of b_hh are folded into b_ih (only the n-gate hidden bias is applied inside
      the recurrent step). Biases stay f32; matmul operands use `compute_dtype`.
    * wfc: (2, H, O_pad); plane 0 multiplies h_fwd, plane 1 h_bwd -> fc(cat([h_bwd, h_fwd])).
    """
    H, O = params['hidden_size'], params['output_size']
    Hp = _round_up(H, h_multiple)
    assert o_pad >= O and o_pad % 128 == 0

    def pack_dir(w_ih, w_hh, b_ih, b_hh):
        wih = jnp.zeros((Hp, 3 * Hp), jnp.float32)
        whh = jnp.zeros((Hp, 3 * Hp), jnp.float32)
        bih = jnp.zeros((3 * Hp,), jnp.float32)
        for g in range(3):
            wih = wih.at[:H, g * Hp:g * Hp + H].set(w_ih[g * H:(g + 1) * H].T)
            whh = whh.at[:H, g * Hp:g * Hp + H].set(w_hh[g * H:(g + 1) * H].T)
            b = b_ih[g * H:(g + 1) * H]
            if g < 2:                                    # fold r/z hidden bias into input bias
                b = b + b_hh[g * H:(g + 1) * H]
            bih = bih.at[g * Hp:g * Hp + H].set(b)
        bhn = jnp.zeros((Hp,), jnp.float32).at[:H].set(b_hh[2 * H:3 * H])
        return wih, whh, bih, bhn

    packs = [pack_dir(params[f'w_ih_{d}'], params[f'w_hh_{d}'],
                      params[f'b_ih_{d}'], params[f'b_hh_{d}']) for d in ('f', 'b')]
    wih = jnp.stack([p[0] for p in packs]).astype(compute_dtype)        # (2, Hp, 3Hp)
    whh = jnp.stack([p[1] for p in packs]).astype(compute_dtype)        # (2, Hp, 3Hp)
    bih = jnp.stack([p[2] for p in packs]).reshape(2, 1, 3 * Hp)        # f32
    bhn = jnp.stack([p[3] for p in packs]).reshape(2, 1, Hp)            # f32

    # out = h_bwd @ W_fc[:, :H].T + h_fwd @ W_fc[:, H:].T + b
    w_fc, b_fc = params['w_fc'], params['b_fc']
    wfc_f = jnp.zeros((Hp, o_pad), jnp.float32).at[:H, :O].set(w_fc[:, H:].T)
    wfc_b = jnp.zeros((Hp, o_pad), jnp.float32).at[:H, :O].set(w_fc[:, :H].T)
    wfc = jnp.stack([wfc_f, wfc_b]).astype(compute_dtype)               # (2, Hp, O_pad)
    bfc = jnp.zeros((1, o_pad), jnp.float32).at[0, :O].set(b_fc)

    emb = jnp.zeros((params['embedding'].shape[0], Hp), jnp.float32)
    emb = emb.at[:, :H].set(params['embedding']).astype(compute_dtype)

    return dict(hidden_size=H, h_pad=Hp, output_size=O, o_pad=o_pad,
                embedding=emb, wih=wih, whh=whh, bih=bih, bhn=bhn, wfc=wfc, bfc=bfc)


# ----------------------------------------------------------------------------- reference

def reference_forward(params, inputs, seq_lengths):
    """Pure-JAX reference from the RAW PyTorch-layout params (validates packing + kernel)."""
    H = params['hidden_size']
    B, T = inputs.shape
    emb = jnp.take(params['embedding'].astype(jnp.float32), inputs.T, axis=0)   # (T, B, H)
    lens = seq_lengths.astype(jnp.int32)
    hi = lax.Precision.HIGHEST

    def run_direction(w_ih, w_hh, b_ih, b_hh, times):
        h = jnp.zeros((B, H), jnp.float32)
        for t in times:
            x = emb[t]
            xr = jnp.dot(x, w_ih[0:H].T, precision=hi) + b_ih[0:H]
            xz = jnp.dot(x, w_ih[H:2 * H].T, precision=hi) + b_ih[H:2 * H]
            xn = jnp.dot(x, w_ih[2 * H:].T, precision=hi) + b_ih[2 * H:]
            hr = jnp.dot(h, w_hh[0:H].T, precision=hi) + b_hh[0:H]
            hz = jnp.dot(h, w_hh[H:2 * H].T, precision=hi) + b_hh[H:2 * H]
            hn = jnp.dot(h, w_hh[2 * H:].T, precision=hi) + b_hh[2 * H:]
            r = jax.nn.sigmoid(xr + hr)
            z = jax.nn.sigmoid(xz + hz)
            n = jnp.tanh(xn + r * hn)
            h_new = (1.0 - z) * n + z * h
            h = jnp.where((t < lens)[:, None], h_new, h)
        return h

    h_f = run_direction(params['w_ih_f'], params['w_hh_f'],
                        params['b_ih_f'], params['b_hh_f'], range(T))
    h_b = run_direction(params['w_ih_b'], params['w_hh_b'],
                        params['b_ih_b'], params['b_hh_b'], range(T - 1, -1, -1))
    hidden_cat = jnp.concatenate([h_b, h_f], axis=1)    # cat([hidden[-1], hidden[-2]])
    return jnp.dot(hidden_cat, params['w_fc'].T, precision=hi) + params['b_fc']


# ----------------------------------------------------------------------------- main

if __name__ == "__main__":
    key = jax.random.PRNGKey(0)
    input_size = 32      # vocab size
    hidden_size = 32
    output_size = 8      # number of classes
    B, T = 4, 8

    pkey, ikey = jax.random.split(key)
    params = init_params(pkey, input_size, hidden_size, output_size)
    inputs = jax.random.randint(ikey, (B, T), 0, input_size, dtype=jnp.int32)
    # pack_padded_sequence expects lengths sorted in decreasing order
    seq_lengths = jnp.array([8, 6, 5, 3], dtype=jnp.int32)

    ref = reference_forward(params, inputs, seq_lengths)

    # f32 operands; small time_block to exercise the cross-chunk state carry
    packed_f32 = pack_params(params, jnp.float32)
    out_f32 = jax.block_until_ready(
        rnn_classifier_forward(packed_f32, inputs, seq_lengths, time_block=4, batch_block=8))
    assert out_f32.shape == (B, output_size)
    assert jnp.allclose(out_f32, ref, atol=2e-3, rtol=2e-3), (out_f32, ref)

    # bf16 operands (default), f32 accumulation + gate math; default (large) tile sizes
    packed_bf16 = pack_params(params)
    out_bf16 = jax.block_until_ready(
        rnn_classifier_forward(packed_bf16, inputs, seq_lengths))
    assert out_bf16.shape == (B, output_size)
    assert jnp.allclose(out_bf16, ref, atol=5e-2, rtol=5e-2), (out_bf16, ref)

    print("KERNEL_OK")
</pallas_src>

<mosaic_0001>
module attributes {stable_mosaic.version = 11 : i64} {
  func.func @kernel(%arg0: i32, %arg1: i32, %arg2: memref<4x8x128xf32, #tpu.memory_space<vmem>>, %arg3: memref<4x8x128xf32, #tpu.memory_space<vmem>>, %arg4: memref<8x1xi32, #tpu.memory_space<vmem>>, %arg5: memref<2x128x384xf32, #tpu.memory_space<any>>, %arg6: memref<2x128x384xf32, #tpu.memory_space<any>>, %arg7: memref<2x1x384xf32, #tpu.memory_space<vmem>>, %arg8: memref<2x1x128xf32, #tpu.memory_space<vmem>>, %arg9: memref<2x128x128xf32, #tpu.memory_space<vmem>>, %arg10: memref<1x128xf32, #tpu.memory_space<vmem>>, %arg11: memref<8x128xf32, #tpu.memory_space<vmem>>, %arg12: memref<2x128x384xf32, #tpu.memory_space<vmem>>, %arg13: memref<2x128x384xf32, #tpu.memory_space<vmem>>, %arg14: memref<2x32x384xf32, #tpu.memory_space<vmem>>, %arg15: memref<2x8x128xf32, #tpu.memory_space<vmem>>, %arg16: memref<2x!tpu.dma_semaphore, #tpu.memory_space<semaphore_mem>>) attributes {dimension_semantics = [#tpu.dimension_semantics<parallel>, #tpu.dimension_semantics<arbitrary>], iteration_bounds = array<i64: 1, 2>, scalar_prefetch = 0 : i64, scratch_operands = 5 : i64, tpu.core_type = #tpu.core_type<tc>, window_params = [{transform_indices = @transform_0, window_bounds = array<i64: 4, 8, 128>}, {transform_indices = @transform_1, window_bounds = array<i64: 4, 8, 128>}, {transform_indices = @transform_2, window_bounds = array<i64: 8, 1>}, {}, {}, {pipeline_mode = #tpu.pipeline_mode<synchronous>, transform_indices = @transform_5, window_bounds = array<i64: 2, 1, 384>}, {pipeline_mode = #tpu.pipeline_mode<synchronous>, transform_indices = @transform_6, window_bounds = array<i64: 2, 1, 128>}, {pipeline_mode = #tpu.pipeline_mode<synchronous>, transform_indices = @transform_7, window_bounds = array<i64: 2, 128, 128>}, {pipeline_mode = #tpu.pipeline_mode<synchronous>, transform_indices = @transform_8, window_bounds = array<i64: 1, 128>}, {transform_indices = @transform_9, window_bounds = array<i64: 8, 128>}]} {
    %c0_i32 = arith.constant 0 : i32
    %0 = arith.cmpi eq, %arg1, %c0_i32 : i32
    %1 = arith.extui %0 : i1 to i32
    %c0_i32_0 = arith.constant 0 : i32
    %2 = arith.cmpi ne, %1, %c0_i32_0 : i32
    scf.if %2 {
      %c0_i32_65 = arith.constant 0 : i32
      %186 = tpu.memref_slice %arg16[%c0_i32_65] : memref<2x!tpu.dma_semaphore, #tpu.memory_space<semaphore_mem>> -> memref<1x!tpu.dma_semaphore, #tpu.memory_space<semaphore_mem>>
      %187 = tpu.memref_squeeze %186 : memref<1x!tpu.dma_semaphore, #tpu.memory_space<semaphore_mem>> -> memref<!tpu.dma_semaphore, #tpu.memory_space<semaphore_mem>>
      tpu.enqueue_dma source(%arg5 : memref<2x128x384xf32, #tpu.memory_space<any>>) target(%arg12 : memref<2x128x384xf32, #tpu.memory_space<vmem>>) target_semaphore(%187 : memref<!tpu.dma_semaphore, #tpu.memory_space<semaphore_mem>>)
      %c1_i32_66 = arith.constant 1 : i32
      %188 = tpu.memref_slice %arg16[%c1_i32_66] : memref<2x!tpu.dma_semaphore, #tpu.memory_space<semaphore_mem>> -> memref<1x!tpu.dma_semaphore, #tpu.memory_space<semaphore_mem>>
      %189 = tpu.memref_squeeze %188 : memref<1x!tpu.dma_semaphore, #tpu.memory_space<semaphore_mem>> -> memref<!tpu.dma_semaphore, #tpu.memory_space<semaphore_mem>>
      tpu.enqueue_dma source(%arg6 : memref<2x128x384xf32, #tpu.memory_space<any>>) target(%arg13 : memref<2x128x384xf32, #tpu.memory_space<vmem>>) target_semaphore(%189 : memref<!tpu.dma_semaphore, #tpu.memory_space<semaphore_mem>>)
      %c0_i32_67 = arith.constant 0 : i32
      %190 = tpu.memref_slice %arg16[%c0_i32_67] : memref<2x!tpu.dma_semaphore, #tpu.memory_space<semaphore_mem>> -> memref<1x!tpu.dma_semaphore, #tpu.memory_space<semaphore_mem>>
      %191 = tpu.memref_squeeze %190 : memref<1x!tpu.dma_semaphore, #tpu.memory_space<semaphore_mem>> -> memref<!tpu.dma_semaphore, #tpu.memory_space<semaphore_mem>>
      tpu.wait_dma2 semaphore(%191 : memref<!tpu.dma_semaphore, #tpu.memory_space<semaphore_mem>>) src(%arg5 : memref<2x128x384xf32, #tpu.memory_space<any>>) dst(%arg12 : memref<2x128x384xf32, #tpu.memory_space<vmem>>)
      %c1_i32_68 = arith.constant 1 : i32
      %192 = tpu.memref_slice %arg16[%c1_i32_68] : memref<2x!tpu.dma_semaphore, #tpu.memory_space<semaphore_mem>> -> memref<1x!tpu.dma_semaphore, #tpu.memory_space<semaphore_mem>>
      %193 = tpu.memref_squeeze %192 : memref<1x!tpu.dma_semaphore, #tpu.memory_space<semaphore_mem>> -> memref<!tpu.dma_semaphore, #tpu.memory_space<semaphore_mem>>
      tpu.wait_dma2 semaphore(%193 : memref<!tpu.dma_semaphore, #tpu.memory_space<semaphore_mem>>) src(%arg6 : memref<2x128x384xf32, #tpu.memory_space<any>>) dst(%arg13 : memref<2x128x384xf32, #tpu.memory_space<vmem>>)
      %cst_69 = arith.constant 0.000000e+00 : f32
      %194 = vector.broadcast %cst_69 : f32 to vector<2x8x128xf32>
      %c0_70 = arith.constant 0 : index
      %c0_71 = arith.constant 0 : index
      %c0_72 = arith.constant 0 : index
      %195 = vector.load %arg15[%c0_70, %c0_71, %c0_72] : memref<2x8x128xf32, #tpu.memory_space<vmem>>, vector<2x8x128xf32>
      tpu.vector_store %arg15[%c0_70, %c0_71, %c0_72], %194 {strides = array<i32>} : memref<2x8x128xf32, #tpu.memory_space<vmem>>, vector<2x8x128xf32>,
    } else {
    }
    %c0 = arith.constant 0 : index
    %c0_1 = arith.constant 0 : index
    %c0_2 = arith.constant 0 : index
    %3 = vector.load %arg12[%c0, %c0_1, %c0_2] : memref<2x128x384xf32, #tpu.memory_space<vmem>>, vector<2x128x384xf32>
    %c0_3 = arith.constant 0 : index
    %c0_4 = arith.constant 0 : index
    %c0_5 = arith.constant 0 : index
    %4 = vector.load %arg2[%c0_3, %c0_4, %c0_5] : memref<4x8x128xf32, #tpu.memory_space<vmem>>, vector<4x8x128xf32>
    %5 = vector.shape_cast %4 : vector<4x8x128xf32> to vector<32x128xf32>
    %c0_6 = arith.constant 0 : index
    %c0_7 = arith.constant 0 : index
    %c0_8 = arith.constant 0 : index
    %6 = vector.load %arg3[%c0_6, %c0_7, %c0_8] : memref<4x8x128xf32, #tpu.memory_space<vmem>>, vector<4x8x128xf32>
    %7 = vector.shape_cast %6 : vector<4x8x128xf32> to vector<32x128xf32>
    %8 = vector.extract_strided_slice %3 {offsets = [0, 0, 0], sizes = [1, 128, 384], strides = [1, 1, 1]} : vector<2x128x384xf32> to vector<1x128x384xf32>
    %9 = vector.shape_cast %8 : vector<1x128x384xf32> to vector<128x384xf32>
    %cst = arith.constant dense<0.000000e+00> : vector<32x384xf32>
    %10 = tpu.matmul %5, %9, %cst {dimension_numbers = #tpu.dot_dimension_numbers<[1], [0], [0], [1], [0, 0, 1, 1], [], []>} : vector<32x128xf32>, vector<128x384xf32>, vector<32x384xf32> -> vector<32x384xf32>
    %c0_9 = arith.constant 0 : index
    %c0_10 = arith.constant 0 : index
    %c0_11 = arith.constant 0 : index
    %11 = vector.load %arg7[%c0_9, %c0_10, %c0_11] : memref<2x1x384xf32, #tpu.memory_space<vmem>>, vector<1x1x384xf32>
    %12 = vector.shape_cast %11 : vector<1x1x384xf32> to vector<1x384xf32>
    %13 = vector.broadcast %12 : vector<1x384xf32> to vector<32x384xf32>
    %14 = arith.addf %10, %13 : vector<32x384xf32>
    %c0_12 = arith.constant 0 : index
    %c0_13 = arith.constant 0 : index
    %c0_14 = arith.constant 0 : index
    %15 = vector.load %arg14[%c0_12, %c0_13, %c0_14] : memref<2x32x384xf32, #tpu.memory_space<vmem>>, vector<1x32x384xf32>
    %16 = vector.shape_cast %15 : vector<1x32x384xf32> to vector<32x384xf32>
    %17 = vector.shape_cast %14 : vector<32x384xf32> to vector<1x32x384xf32>
    tpu.vector_store %arg14[%c0_12, %c0_13, %c0_14], %17 {strides = array<i32>} : memref<2x32x384xf32, #tpu.memory_space<vmem>>, vector<1x32x384xf32>,
    %18 = vector.extract_strided_slice %3 {offsets = [1, 0, 0], sizes = [1, 128, 384], strides = [1, 1, 1]} : vector<2x128x384xf32> to vector<1x128x384xf32>
    %19 = vector.shape_cast %18 : vector<1x128x384xf32> to vector<128x384xf32>
    %cst_15 = arith.constant dense<0.000000e+00> : vector<32x384xf32>
    %20 = tpu.matmul %7, %19, %cst_15 {dimension_numbers = #tpu.dot_dimension_numbers<[1], [0], [0], [1], [0, 0, 1, 1], [], []>} : vector<32x128xf32>, vector<128x384xf32>, vector<32x384xf32> -> vector<32x384xf32>
    %c1 = arith.constant 1 : index
    %c0_16 = arith.constant 0 : index
    %c0_17 = arith.constant 0 : index
    %21 = vector.load %arg7[%c1, %c0_16, %c0_17] : memref<2x1x384xf32, #tpu.memory_space<vmem>>, vector<1x1x384xf32>
    %22 = vector.shape_cast %21 : vector<1x1x384xf32> to vector<1x384xf32>
    %23 = vector.broadcast %22 : vector<1x384xf32> to vector<32x384xf32>
    %24 = arith.addf %20, %23 : vector<32x384xf32>
    %c1_18 = arith.constant 1 : index
    %c0_19 = arith.constant 0 : index
    %c0_20 = arith.constant 0 : index
    %25 = vector.load %arg14[%c1_18, %c0_19, %c0_20] : memref<2x32x384xf32, #tpu.memory_space<vmem>>, vector<1x32x384xf32>
    %26 = vector.shape_cast %25 : vector<1x32x384xf32> to vector<32x384xf32>
    %27 = vector.shape_cast %24 : vector<32x384xf32> to vector<1x32x384xf32>
    tpu.vector_store %arg14[%c1_18, %c0_19, %c0_20], %27 {strides = array<i32>} : memref<2x32x384xf32, #tpu.memory_space<vmem>>, vector<1x32x384xf32>,
    %c0_21 = arith.constant 0 : index
    %c0_22 = arith.constant 0 : index
    %c0_23 = arith.constant 0 : index
    %28 = vector.load %arg13[%c0_21, %c0_22, %c0_23] : memref<2x128x384xf32, #tpu.memory_space<vmem>>, vector<2x128x384xf32>
    %c0_24 = arith.constant 0 : index
    %c0_25 = arith.constant 0 : index
    %c0_26 = arith.constant 0 : index
    %29 = vector.load %arg8[%c0_24, %c0_25, %c0_26] : memref<2x1x128xf32, #tpu.memory_space<vmem>>, vector<2x1x128xf32>
    %c0_27 = arith.constant 0 : index
    %c0_28 = arith.constant 0 : index
    %30 = vector.load %arg4[%c0_27, %c0_28] : memref<8x1xi32, #tpu.memory_space<vmem>>, vector<8x1xi32>
    %31 = vector.shape_cast %30 : vector<8x1xi32> to vector<1x8x1xi32>
    %c4_i32 = arith.constant 4 : i32
    %32 = arith.muli %arg1, %c4_i32 : i32
    %c0_29 = arith.constant 0 : index
    %c0_30 = arith.constant 0 : index
    %c0_31 = arith.constant 0 : index
    %33 = vector.load %arg15[%c0_29, %c0_30, %c0_31] : memref<2x8x128xf32, #tpu.memory_space<vmem>>, vector<2x8x128xf32>
    %c0_i32_32 = arith.constant 0 : i32
    %c8_i32 = arith.constant 8 : i32
    %34 = arith.muli %c0_i32_32, %c8_i32 : i32
    %35 = tpu.assume_multiple %34, 8 : i32
    %c0_33 = arith.constant 0 : index
    %36 = arith.index_cast %35 : i32 to index
    %c0_34 = arith.constant 0 : index
    %37 = vector.load %arg14[%c0_33, %36, %c0_34] : memref<2x32x384xf32, #tpu.memory_space<vmem>>, vector<2x8x384xf32>
    "tpu.trace_start"() <{level = 10 : i32, message = "dbh,dhk->dbk"}> : () -> ()
    %cst_35 = arith.constant dense<0.000000e+00> : vector<2x8x384xf32>
    %38 = tpu.matmul %33, %28, %cst_35 {dimension_numbers = #tpu.dot_dimension_numbers<[2], [1], [1], [2], [0, 0, 0, 1, 1, 2], [0], [0]>} : vector<2x8x128xf32>, vector<2x128x384xf32>, vector<2x8x384xf32> -> vector<2x8x384xf32>
    "tpu.trace_stop"() : () -> ()
    %39 = vector.extract_strided_slice %37 {offsets = [0, 0, 0], sizes = [2, 8, 256], strides = [1, 1, 1]} : vector<2x8x384xf32> to vector<2x8x256xf32>
    %40 = vector.extract_strided_slice %38 {offsets = [0, 0, 0], sizes = [2, 8, 256], strides = [1, 1, 1]} : vector<2x8x384xf32> to vector<2x8x256xf32>
    %41 = arith.addf %39, %40 : vector<2x8x256xf32>
    %42 = arith.negf %41 : vector<2x8x256xf32>
    %43 = math.exp %42 : vector<2x8x256xf32>
    %cst_36 = arith.constant 1.000000e+00 : f32
    %44 = vector.broadcast %cst_36 : f32 to vector<2x8x256xf32>
    %45 = arith.addf %44, %43 : vector<2x8x256xf32>
    %46 = arith.divf %44, %45 : vector<2x8x256xf32>
    %47 = vector.extract_strided_slice %46 {offsets = [0, 0, 0], sizes = [2, 8, 128], strides = [1, 1, 1]} : vector<2x8x256xf32> to vector<2x8x128xf32>
    %48 = vector.extract_strided_slice %46 {offsets = [0, 0, 128], sizes = [2, 8, 128], strides = [1, 1, 1]} : vector<2x8x256xf32> to vector<2x8x128xf32>
    %49 = vector.extract_strided_slice %37 {offsets = [0, 0, 256], sizes = [2, 8, 128], strides = [1, 1, 1]} : vector<2x8x384xf32> to vector<2x8x128xf32>
    %50 = vector.extract_strided_slice %38 {offsets = [0, 0, 256], sizes = [2, 8, 128], strides = [1, 1, 1]} : vector<2x8x384xf32> to vector<2x8x128xf32>
    %51 = vector.broadcast %29 : vector<2x1x128xf32> to vector<2x8x128xf32>
    %52 = arith.addf %50, %51 : vector<2x8x128xf32>
    %53 = arith.mulf %47, %52 : vector<2x8x128xf32>
    %54 = arith.addf %49, %53 : vector<2x8x128xf32>
    %55 = math.tanh %54 : vector<2x8x128xf32>
    %cst_37 = arith.constant 1.000000e+00 : f32
    %56 = vector.broadcast %cst_37 : f32 to vector<2x8x128xf32>
    %57 = arith.subf %56, %48 : vector<2x8x128xf32>
    %58 = arith.mulf %57, %55 : vector<2x8x128xf32>
    %59 = arith.mulf %48, %33 : vector<2x8x128xf32>
    %60 = arith.addf %58, %59 : vector<2x8x128xf32>
    %61 = arith.addi %32, %c0_i32_32 : i32
    %62 = vector.broadcast %61 : i32 to vector<1x8x1xi32>
    %63 = arith.cmpi slt, %62, %31 : vector<1x8x1xi32>
    %c7_i32 = arith.constant 7 : i32
    %64 = arith.subi %c7_i32, %61 : i32
    %65 = vector.broadcast %64 : i32 to vector<1x8x1xi32>
    %66 = arith.cmpi slt, %65, %31 : vector<1x8x1xi32>
    %67 = tpu.concatenate %63, %66 in 0 : vector<1x8x1xi1>, vector<1x8x1xi1> -> vector<2x8x1xi1>
    %68 = vector.shape_cast %67 : vector<2x8x1xi1> to vector<2x8x1xi1>
    %69 = vector.broadcast %68 : vector<2x8x1xi1> to vector<2x8x128xi1>
    %70 = arith.select %69, %60, %33 : vector<2x8x128xi1>, vector<2x8x128xf32>
    %c1_i32 = arith.constant 1 : i32
    %c8_i32_38 = arith.constant 8 : i32
    %71 = arith.muli %c1_i32, %c8_i32_38 : i32
    %72 = tpu.assume_multiple %71, 8 : i32
    %c0_39 = arith.constant 0 : index
    %73 = arith.index_cast %72 : i32 to index
    %c0_40 = arith.constant 0 : index
    %74 = vector.load %arg14[%c0_39, %73, %c0_40] : memref<2x32x384xf32, #tpu.memory_space<vmem>>, vector<2x8x384xf32>
    "tpu.trace_start"() <{level = 10 : i32, message = "dbh,dhk->dbk"}> : () -> ()
    %cst_41 = arith.constant dense<0.000000e+00> : vector<2x8x384xf32>
    %75 = tpu.matmul %70, %28, %cst_41 {dimension_numbers = #tpu.dot_dimension_numbers<[2], [1], [1], [2], [0, 0, 0, 1, 1, 2], [0], [0]>} : vector<2x8x128xf32>, vector<2x128x384xf32>, vector<2x8x384xf32> -> vector<2x8x384xf32>
    "tpu.trace_stop"() : () -> ()
    %76 = vector.extract_strided_slice %74 {offsets = [0, 0, 0], sizes = [2, 8, 256], strides = [1, 1, 1]} : vector<2x8x384xf32> to vector<2x8x256xf32>
    %77 = vector.extract_strided_slice %75 {offsets = [0, 0, 0], sizes = [2, 8, 256], strides = [1, 1, 1]} : vector<2x8x384xf32> to vector<2x8x256xf32>
    %78 = arith.addf %76, %77 : vector<2x8x256xf32>
    %79 = arith.negf %78 : vector<2x8x256xf32>
    %80 = math.exp %79 : vector<2x8x256xf32>
    %cst_42 = arith.constant 1.000000e+00 : f32
    %81 = vector.broadcast %cst_42 : f32 to vector<2x8x256xf32>
    %82 = arith.addf %81, %80 : vector<2x8x256xf32>
    %83 = arith.divf %81, %82 : vector<2x8x256xf32>
    %84 = vector.extract_strided_slice %83 {offsets = [0, 0, 0], sizes = [2, 8, 128], strides = [1, 1, 1]} : vector<2x8x256xf32> to vector<2x8x128xf32>
    %85 = vector.extract_strided_slice %83 {offsets = [0, 0, 128], sizes = [2, 8, 128], strides = [1, 1, 1]} : vector<2x8x256xf32> to vector<2x8x128xf32>
    %86 = vector.extract_strided_slice %74 {offsets = [0, 0, 256], sizes = [2, 8, 128], strides = [1, 1, 1]} : vector<2x8x384xf32> to vector<2x8x128xf32>
    %87 = vector.extract_strided_slice %75 {offsets = [0, 0, 256], sizes = [2, 8, 128], strides = [1, 1, 1]} : vector<2x8x384xf32> to vector<2x8x128xf32>
    %88 = vector.broadcast %29 : vector<2x1x128xf32> to vector<2x8x128xf32>
    %89 = arith.addf %87, %88 : vector<2x8x128xf32>
    %90 = arith.mulf %84, %89 : vector<2x8x128xf32>
    %91 = arith.addf %86, %90 : vector<2x8x128xf32>
    %92 = math.tanh %91 : vector<2x8x128xf32>
    %cst_43 = arith.constant 1.000000e+00 : f32
    %93 = vector.broadcast %cst_43 : f32 to vector<2x8x128xf32>
    %94 = arith.subf %93, %85 : vector<2x8x128xf32>
    %95 = arith.mulf %94, %92 : vector<2x8x128xf32>
    %96 = arith.mulf %85, %70 : vector<2x8x128xf32>
    %97 = arith.addf %95, %96 : vector<2x8x128xf32>
    %98 = arith.addi %32, %c1_i32 : i32
    %99 = vector.broadcast %98 : i32 to vector<1x8x1xi32>
    %100 = arith.cmpi slt, %99, %31 : vector<1x8x1xi32>
    %c7_i32_44 = arith.constant 7 : i32
    %101 = arith.subi %c7_i32_44, %98 : i32
    %102 = vector.broadcast %101 : i32 to vector<1x8x1xi32>
    %103 = arith.cmpi slt, %102, %31 : vector<1x8x1xi32>
    %104 = tpu.concatenate %100, %103 in 0 : vector<1x8x1xi1>, vector<1x8x1xi1> -> vector<2x8x1xi1>
    %105 = vector.shape_cast %104 : vector<2x8x1xi1> to vector<2x8x1xi1>
    %106 = vector.broadcast %105 : vector<2x8x1xi1> to vector<2x8x128xi1>
    %107 = arith.select %106, %97, %70 : vector<2x8x128xi1>, vector<2x8x128xf32>
    %c2_i32 = arith.constant 2 : i32
    %c8_i32_45 = arith.constant 8 : i32
    %108 = arith.muli %c2_i32, %c8_i32_45 : i32
    %109 = tpu.assume_multiple %108, 8 : i32
    %c0_46 = arith.constant 0 : index
    %110 = arith.index_cast %109 : i32 to index
    %c0_47 = arith.constant 0 : index
    %111 = vector.load %arg14[%c0_46, %110, %c0_47] : memref<2x32x384xf32, #tpu.memory_space<vmem>>, vector<2x8x384xf32>
    "tpu.trace_start"() <{level = 10 : i32, message = "dbh,dhk->dbk"}> : () -> ()
    %cst_48 = arith.constant dense<0.000000e+00> : vector<2x8x384xf32>
    %112 = tpu.matmul %107, %28, %cst_48 {dimension_numbers = #tpu.dot_dimension_numbers<[2], [1], [1], [2], [0, 0, 0, 1, 1, 2], [0], [0]>} : vector<2x8x128xf32>, vector<2x128x384xf32>, vector<2x8x384xf32> -> vector<2x8x384xf32>
    "tpu.trace_stop"() : () -> ()
    %113 = vector.extract_strided_slice %111 {offsets = [0, 0, 0], sizes = [2, 8, 256], strides = [1, 1, 1]} : vector<2x8x384xf32> to vector<2x8x256xf32>
    %114 = vector.extract_strided_slice %112 {offsets = [0, 0, 0], sizes = [2, 8, 256], strides = [1, 1, 1]} : vector<2x8x384xf32> to vector<2x8x256xf32>
    %115 = arith.addf %113, %114 : vector<2x8x256xf32>
    %116 = arith.negf %115 : vector<2x8x256xf32>
    %117 = math.exp %116 : vector<2x8x256xf32>
    %cst_49 = arith.constant 1.000000e+00 : f32
    %118 = vector.broadcast %cst_49 : f32 to vector<2x8x256xf32>
    %119 = arith.addf %118, %117 : vector<2x8x256xf32>
    %120 = arith.divf %118, %119 : vector<2x8x256xf32>
    %121 = vector.extract_strided_slice %120 {offsets = [0, 0, 0], sizes = [2, 8, 128], strides = [1, 1, 1]} : vector<2x8x256xf32> to vector<2x8x128xf32>
    %122 = vector.extract_strided_slice %120 {offsets = [0, 0, 128], sizes = [2, 8, 128], strides = [1, 1, 1]} : vector<2x8x256xf32> to vector<2x8x128xf32>
    %123 = vector.extract_strided_slice %111 {offsets = [0, 0, 256], sizes = [2, 8, 128], strides = [1, 1, 1]} : vector<2x8x384xf32> to vector<2x8x128xf32>
    %124 = vector.extract_strided_slice %112 {offsets = [0, 0, 256], sizes = [2, 8, 128], strides = [1, 1, 1]} : vector<2x8x384xf32> to vector<2x8x128xf32>
    %125 = vector.broadcast %29 : vector<2x1x128xf32> to vector<2x8x128xf32>
    %126 = arith.addf %124, %125 : vector<2x8x128xf32>
    %127 = arith.mulf %121, %126 : vector<2x8x128xf32>
    %128 = arith.addf %123, %127 : vector<2x8x128xf32>
    %129 = math.tanh %128 : vector<2x8x128xf32>
    %cst_50 = arith.constant 1.000000e+00 : f32
    %130 = vector.broadcast %cst_50 : f32 to vector<2x8x128xf32>
    %131 = arith.subf %130, %122 : vector<2x8x128xf32>
    %132 = arith.mulf %131, %129 : vector<2x8x128xf32>
    %133 = arith.mulf %122, %107 : vector<2x8x128xf32>
    %134 = arith.addf %132, %133 : vector<2x8x128xf32>
    %135 = arith.addi %32, %c2_i32 : i32
    %136 = vector.broadcast %135 : i32 to vector<1x8x1xi32>
    %137 = arith.cmpi slt, %136, %31 : vector<1x8x1xi32>
    %c7_i32_51 = arith.constant 7 : i32
    %138 = arith.subi %c7_i32_51, %135 : i32
    %139 = vector.broadcast %138 : i32 to vector<1x8x1xi32>
    %140 = arith.cmpi slt, %139, %31 : vector<1x8x1xi32>
    %141 = tpu.concatenate %137, %140 in 0 : vector<1x8x1xi1>, vector<1x8x1xi1> -> vector<2x8x1xi1>
    %142 = vector.shape_cast %141 : vector<2x8x1xi1> to vector<2x8x1xi1>
    %143 = vector.broadcast %142 : vector<2x8x1xi1> to vector<2x8x128xi1>
    %144 = arith.select %143, %134, %107 : vector<2x8x128xi1>, vector<2x8x128xf32>
    %c3_i32 = arith.constant 3 : i32
    %c8_i32_52 = arith.constant 8 : i32
    %145 = arith.muli %c3_i32, %c8_i32_52 : i32
    %146 = tpu.assume_multiple %145, 8 : i32
    %c0_53 = arith.constant 0 : index
    %147 = arith.index_cast %146 : i32 to index
    %c0_54 = arith.constant 0 : index
    %148 = vector.load %arg14[%c0_53, %147, %c0_54] : memref<2x32x384xf32, #tpu.memory_space<vmem>>, vector<2x8x384xf32>
    "tpu.trace_start"() <{level = 10 : i32, message = "dbh,dhk->dbk"}> : () -> ()
    %cst_55 = arith.constant dense<0.000000e+00> : vector<2x8x384xf32>
    %149 = tpu.matmul %144, %28, %cst_55 {dimension_numbers = #tpu.dot_dimension_numbers<[2], [1], [1], [2], [0, 0, 0, 1, 1, 2], [0], [0]>} : vector<2x8x128xf32>, vector<2x128x384xf32>, vector<2x8x384xf32> -> vector<2x8x384xf32>
    "tpu.trace_stop"() : () -> ()
    %150 = vector.extract_strided_slice %148 {offsets = [0, 0, 0], sizes = [2, 8, 256], strides = [1, 1, 1]} : vector<2x8x384xf32> to vector<2x8x256xf32>
    %151 = vector.extract_strided_slice %149 {offsets = [0, 0, 0], sizes = [2, 8, 256], strides = [1, 1, 1]} : vector<2x8x384xf32> to vector<2x8x256xf32>
    %152 = arith.addf %150, %151 : vector<2x8x256xf32>
    %153 = arith.negf %152 : vector<2x8x256xf32>
    %154 = math.exp %153 : vector<2x8x256xf32>
    %cst_56 = arith.constant 1.000000e+00 : f32
    %155 = vector.broadcast %cst_56 : f32 to vector<2x8x256xf32>
    %156 = arith.addf %155, %154 : vector<2x8x256xf32>
    %157 = arith.divf %155, %156 : vector<2x8x256xf32>
    %158 = vector.extract_strided_slice %157 {offsets = [0, 0, 0], sizes = [2, 8, 128], strides = [1, 1, 1]} : vector<2x8x256xf32> to vector<2x8x128xf32>
    %159 = vector.extract_strided_slice %157 {offsets = [0, 0, 128], sizes = [2, 8, 128], strides = [1, 1, 1]} : vector<2x8x256xf32> to vector<2x8x128xf32>
    %160 = vector.extract_strided_slice %148 {offsets = [0, 0, 256], sizes = [2, 8, 128], strides = [1, 1, 1]} : vector<2x8x384xf32> to vector<2x8x128xf32>
    %161 = vector.extract_strided_slice %149 {offsets = [0, 0, 256], sizes = [2, 8, 128], strides = [1, 1, 1]} : vector<2x8x384xf32> to vector<2x8x128xf32>
    %162 = vector.broadcast %29 : vector<2x1x128xf32> to vector<2x8x128xf32>
    %163 = arith.addf %161, %162 : vector<2x8x128xf32>
    %164 = arith.mulf %158, %163 : vector<2x8x128xf32>
    %165 = arith.addf %160, %164 : vector<2x8x128xf32>
    %166 = math.tanh %165 : vector<2x8x128xf32>
    %cst_57 = arith.constant 1.000000e+00 : f32
    %167 = vector.broadcast %cst_57 : f32 to vector<2x8x128xf32>
    %168 = arith.subf %167, %159 : vector<2x8x128xf32>
    %169 = arith.mulf %168, %166 : vector<2x8x128xf32>
    %170 = arith.mulf %159, %144 : vector<2x8x128xf32>
    %171 = arith.addf %169, %170 : vector<2x8x128xf32>
    %172 = arith.addi %32, %c3_i32 : i32
    %173 = vector.broadcast %172 : i32 to vector<1x8x1xi32>
    %174 = arith.cmpi slt, %173, %31 : vector<1x8x1xi32>
    %c7_i32_58 = arith.constant 7 : i32
    %175 = arith.subi %c7_i32_58, %172 : i32
    %176 = vector.broadcast %175 : i32 to vector<1x8x1xi32>
    %177 = arith.cmpi slt, %176, %31 : vector<1x8x1xi32>
    %178 = tpu.concatenate %174, %177 in 0 : vector<1x8x1xi1>, vector<1x8x1xi1> -> vector<2x8x1xi1>
    %179 = vector.shape_cast %178 : vector<2x8x1xi1> to vector<2x8x1xi1>
    %180 = vector.broadcast %179 : vector<2x8x1xi1> to vector<2x8x128xi1>
    %181 = arith.select %180, %171, %144 : vector<2x8x128xi1>, vector<2x8x128xf32>
    %c4_i32_59 = arith.constant 4 : i32
    %c0_60 = arith.constant 0 : index
    %c0_61 = arith.constant 0 : index
    %c0_62 = arith.constant 0 : index
    %182 = vector.load %arg15[%c0_60, %c0_61, %c0_62] : memref<2x8x128xf32, #tpu.memory_space<vmem>>, vector<2x8x128xf32>
    tpu.vector_store %arg15[%c0_60, %c0_61, %c0_62], %181 {strides = array<i32>} : memref<2x8x128xf32, #tpu.memory_space<vmem>>, vector<2x8x128xf32>,
    %c1_i32_63 = arith.constant 1 : i32
    %183 = arith.cmpi eq, %arg1, %c1_i32_63 : i32
    %184 = arith.extui %183 : i1 to i32
    %c0_i32_64 = arith.constant 0 : i32
    %185 = arith.cmpi ne, %184, %c0_i32_64 : i32
    scf.if %185 {
      %c0_65 = arith.constant 0 : index
      %c0_66 = arith.constant 0 : index
      %c0_67 = arith.constant 0 : index
      %186 = vector.load %arg15[%c0_65, %c0_66, %c0_67] : memref<2x8x128xf32, #tpu.memory_space<vmem>>, vector<2x8x128xf32>
      %c0_68 = arith.constant 0 : index
      %c0_69 = arith.constant 0 : index
      %c0_70 = arith.constant 0 : index
      %187 = vector.load %arg9[%c0_68, %c0_69, %c0_70] : memref<2x128x128xf32, #tpu.memory_space<vmem>>, vector<2x128x128xf32>
      %188 = vector.extract_strided_slice %186 {offsets = [0, 0, 0], sizes = [1, 8, 128], strides = [1, 1, 1]} : vector<2x8x128xf32> to vector<1x8x128xf32>
      %189 = vector.shape_cast %188 : vector<1x8x128xf32> to vector<8x128xf32>
      %190 = vector.extract_strided_slice %187 {offsets = [0, 0, 0], sizes = [1, 128, 128], strides = [1, 1, 1]} : vector<2x128x128xf32> to vector<1x128x128xf32>
      %191 = vector.shape_cast %190 : vector<1x128x128xf32> to vector<128x128xf32>
      %cst_71 = arith.constant dense<0.000000e+00> : vector<8x128xf32>
      %192 = tpu.matmul %189, %191, %cst_71 {dimension_numbers = #tpu.dot_dimension_numbers<[1], [0], [0], [1], [0, 0, 1, 1], [], []>} : vector<8x128xf32>, vector<128x128xf32>, vector<8x128xf32> -> vector<8x128xf32>
      %193 = vector.extract_strided_slice %186 {offsets = [1, 0, 0], sizes = [1, 8, 128], strides = [1, 1, 1]} : vector<2x8x128xf32> to vector<1x8x128xf32>
      %194 = vector.shape_cast %193 : vector<1x8x128xf32> to vector<8x128xf32>
      %195 = vector.extract_strided_slice %187 {offsets = [1, 0, 0], sizes = [1, 128, 128], strides = [1, 1, 1]} : vector<2x128x128xf32> to vector<1x128x128xf32>
      %196 = vector.shape_cast %195 : vector<1x128x128xf32> to vector<128x128xf32>
      %cst_72 = arith.constant dense<0.000000e+00> : vector<8x128xf32>
      %197 = tpu.matmul %194, %196, %cst_72 {dimension_numbers = #tpu.dot_dimension_numbers<[1], [0], [0], [1], [0, 0, 1, 1], [], []>} : vector<8x128xf32>, vector<128x128xf32>, vector<8x128xf32> -> vector<8x128xf32>
      %198 = arith.addf %192, %197 : vector<8x128xf32>
      %c0_73 = arith.constant 0 : index
      %c0_74 = arith.constant 0 : index
      %199 = vector.load %arg10[%c0_73, %c0_74] : memref<1x128xf32, #tpu.memory_space<vmem>>, vector<1x128xf32>
      %200 = vector.broadcast %199 : vector<1x128xf32> to vector<8x128xf32>
      %201 = arith.addf %198, %200 : vector<8x128xf32>
      %c0_75 = arith.constant 0 : index
      %c0_76 = arith.constant 0 : index
      %202 = vector.load %arg11[%c0_75, %c0_76] : memref<8x128xf32, #tpu.memory_space<vmem>>, vector<8x128xf32>
      tpu.vector_store %arg11[%c0_75, %c0_76], %201 {strides = array<i32>} : memref<8x128xf32, #tpu.memory_space<vmem>>, vector<8x128xf32>,
    } else {
    }
    return
  }
  func.func @transform_0(%arg0: i32, %arg1: i32) -> (i32, i32, i32) {
    %c0_i32 = arith.constant 0 : i32
    %c0_i32_0 = arith.constant 0 : i32
    return %arg1, %arg0, %c0_i32 : i32, i32, i32
  }
  func.func @transform_1(%arg0: i32, %arg1: i32) -> (i32, i32, i32) {
    %c0_i32 = arith.constant 0 : i32
    %c0_i32_0 = arith.constant 0 : i32
    return %arg1, %arg0, %c0_i32 : i32, i32, i32
  }
  func.func @transform_2(%arg0: i32, %arg1: i32) -> (i32, i32) {
    %c0_i32 = arith.constant 0 : i32
    %c0_i32_0 = arith.constant 0 : i32
    return %arg0, %c0_i32 : i32, i32
  }
  func.func @transform_5(%arg0: i32, %arg1: i32) -> (i32, i32, i32) {
    %c0_i32 = arith.constant 0 : i32
    %c0_i32_0 = arith.constant 0 : i32
    %c0_i32_1 = arith.constant 0 : i32
    %c0_i32_2 = arith.constant 0 : i32
    return %c0_i32, %c0_i32_0, %c0_i32_1 : i32, i32, i32
  }
  func.func @transform_6(%arg0: i32, %arg1: i32) -> (i32, i32, i32) {
    %c0_i32 = arith.constant 0 : i32
    %c0_i32_0 = arith.constant 0 : i32
    %c0_i32_1 = arith.constant 0 : i32
    %c0_i32_2 = arith.constant 0 : i32
    return %c0_i32, %c0_i32_0, %c0_i32_1 : i32, i32, i32
  }
  func.func @transform_7(%arg0: i32, %arg1: i32) -> (i32, i32, i32) {
    %c0_i32 = arith.constant 0 : i32
    %c0_i32_0 = arith.constant 0 : i32
    %c0_i32_1 = arith.constant 0 : i32
    %c0_i32_2 = arith.constant 0 : i32
    return %c0_i32, %c0_i32_0, %c0_i32_1 : i32, i32, i32
  }
  func.func @transform_8(%arg0: i32, %arg1: i32) -> (i32, i32) {
    %c0_i32 = arith.constant 0 : i32
    %c0_i32_0 = arith.constant 0 : i32
    %c0_i32_1 = arith.constant 0 : i32
    return %c0_i32, %c0_i32_0 : i32, i32
  }
  func.func @transform_9(%arg0: i32, %arg1: i32) -> (i32, i32) {
    %c0_i32 = arith.constant 0 : i32
    %c0_i32_0 = arith.constant 0 : i32
    return %arg0, %c0_i32 : i32, i32
  }
}

</mosaic_0001>

<llo_original>
// kernel: tpu_custom_call.1
$region0: #{tpu_custom_call.1}
  #allocation0 [shape = 'u32[]', space=smem, size = 0x4, offset = 0x4, fixed_abs, tag = 'smem constant byte address 0x4 - core index']
  #allocation1 [shape = 'u32[72,128]{1,0:T(1,128)}', space=vmem, size = 0x9000, scoped, tag = 'internal scratch']
  #allocation2 [shape = 'f32[2,128,384]{2,1,0:T(8,128)}', space=vmem, size = 0x60000, scoped, tag = 'scratch operand']
  #allocation3 [shape = 'f32[2,128,384]{2,1,0:T(8,128)}', space=vmem, size = 0x60000, scoped, tag = 'scratch operand']
  #allocation4 [shape = 'f32[2,32,384]{2,1,0:T(8,128)}', space=vmem, size = 0x18000, scoped, tag = 'scratch operand']
  #allocation5 [shape = 'f32[2,8,128]{2,1,0:T(8,128)}', space=vmem, size = 0x2000, scoped, tag = 'scratch operand']
  #allocation6 [shape = 's32[2]{0}', space=sflag, size = 0x8, scoped, tag = 'scratch operand']
  #allocation14 [shape = 's32[]', space=sflag, size = 0x4, offset = 0, fixed_abs, tag = 'sflag constant byte address 0x0 - dummy sync flag']
  #allocation15 [shape = 's32[]', space=sflag, size = 0x4, offset = 0, fixed_abs, tag = 'sflag constant byte address 0x0 - dummy sync flag']
  #allocation16 [shape = 'u32[]', space=smem, size = 0x4, offset = 0x44, fixed_abs, tag = 'smem constant byte address 0x44 - assertion arg 0']
  #allocation17 [shape = 'u32[]', space=smem, size = 0x4, offset = 0x48, fixed_abs, tag = 'smem constant byte address 0x48 - assertion arg 1']
  #allocation18 [shape = 's32[]', space=sflag, size = 0x4, offset = 0, fixed_abs, tag = 'sflag constant byte address 0x0 - dummy sync flag']
  #allocation19 [shape = 's32[]', space=sflag, size = 0x4, offset = 0, fixed_abs, tag = 'sflag constant byte address 0x0 - dummy sync flag']
  %s0 = inlined_call_operand.hbm [shape: f32[8,8,128], index: 0, kind: input, shape index: {}]
  %s1 = inlined_call_operand.hbm [shape: f32[8,8,128], index: 1, kind: input, shape index: {}]
  %s2 = inlined_call_operand.vmem [shape: s32[8,1], index: 2, kind: input, shape index: {}]
  %s3 = inlined_call_operand.hbm [shape: f32[2,128,384], index: 3, kind: input, shape index: {}]
  %s4 = inlined_call_operand.hbm [shape: f32[2,128,384], index: 4, kind: input, shape index: {}]
  %s5 = inlined_call_operand.vmem [shape: f32[2,1,384], index: 5, kind: input, shape index: {}]
  %s6 = inlined_call_operand.vmem [shape: f32[2,1,128], index: 6, kind: input, shape index: {}]
  %s7 = inlined_call_operand.hbm [shape: f32[2,128,128], index: 7, kind: input, shape index: {}]
  %s8 = inlined_call_operand.vmem [shape: f32[1,128], index: 8, kind: input, shape index: {}]
  %s9 = inlined_call_operand.hbm [shape: f32[8,128], index: 9, kind: output, shape index: {}]
  %s10 = sld [smem:[#allocation0]]
  $region89: #{tpu_custom_call.1} parent=0
    _
  %s12 = ssub.s32 1, %s10
  %s13 = scalar_select 0, %s12, %s10
  $region1: #{tpu_custom_call.1} parent=0
    #allocation7 [shape = 'u8[32768]{0}', space=vmem, size = 0x8000, scoped, tag = 'input window, operand 0']
    #allocation8 [shape = 's32[2]{0}', space=sflag, size = 0x8, scoped, tag = 'scoped memory for tpu_custom_call.1']
    #allocation9 [shape = 's32[2]{0}', space=sflag, size = 0x8, scoped, tag = 'scoped memory for tpu_custom_call.1']
    #allocation10 [shape = 'u8[32768]{0}', space=vmem, size = 0x8000, scoped, tag = 'input window, operand 1']
    #allocation11 [shape = 's32[2]{0}', space=sflag, size = 0x8, scoped, tag = 'scoped memory for tpu_custom_call.1']
    #allocation12 [shape = 'u8[131072]{0}', space=vmem, size = 0x20000, scoped, tag = 'input window, operand 7, single buffered']
    #allocation13 [shape = 'u8[4096]{0}', space=vmem, size = 0x1000, scoped, tag = 'output window, operand 0, single buffered']
    %14 = vsyncpa [#allocation8], 0
    %s15 = scalar_lea.sflag [#allocation8], 1
    %16 = vsyncpa %s15, 0
    %17 = vsyncpa [#allocation11], 0
    %s18 = scalar_lea.sflag [#allocation11], 1
    %19 = vsyncpa %s18, 0
    %20 = vsyncpa [#allocation9], 0
    loop: start=0, step=1, limit=4
    $region2: #{tpu_custom_call.1} parent=1 // loop_pre_header
      _
    $region3: #{tpu_custom_call.1} parent=1 // loop_header
      %s22 = sphi 0, %s26
      %p23 = scmp.ge.s32.totalorder %s22, 4
      %s29 = sphi 0, %s41
      %s30 = sphi 0, %s37
      %s31 = sphi 0, %s29
      %s32 = sphi 0, %s30
      %s33 = sphi 0, %s31
      %s34 = sphi 0, %s32
      %s46 = sphi 0, %s48
      %s49 = sphi 0, %s46
      %s50 = sphi 0, %s49
      %s66 = sphi 0, %s50
      %s74 = sphi 0, %s76
      %s77 = sphi 0, %s74
      %s78 = sphi 0, %s77
      %s94 = sphi 0, %s78
      %s100 = sphi 0, %s102
      %s103 = sphi 0, %s100
      %s104 = sphi 0, %s103
      %s120 = sphi 0, %s104
      %s124 = sphi 0, %s124
      %s126 = sphi 0, %s124
      %s127 = sphi 0, %s126
      %s141 = sphi 0, %s127
      %s145 = sphi 0, %s145
      %s147 = sphi 0, %s145
      %s148 = sphi 0, %s147
      %s162 = sphi 0, %s148
      %s166 = sphi 0, %s166
      %s168 = sphi 0, %s166
      %s169 = sphi 0, %s168
      %s183 = sphi 0, %s169
      %s187 = sphi 0, %s187
      %s189 = sphi 0, %s187
      %s190 = sphi 0, %s189
      %s204 = sphi 0, %s190
      %s210 = sphi 0, %s212
      %s213 = sphi 0, %s210
      %s214 = sphi 0, %s213
      %s230 = sphi 0, %s214
    $region4: #{tpu_custom_call.1} parent=1 // loop_header_branch
      %25 = sbr.rel (%p23) target = $region8
    $region5: #{tpu_custom_call.1} parent=1 // loop_body
      %s27 = ssub.s32 %s22, 1
      %s28 = ssub.s32 %s22, 2
      %s35 = sadd.s32 1, %s30
      %p36 = scmp.ge.s32.totalorder %s35, 2
      %s37 = scalar_select %p36, 0, %s35
      %s38 = sadd.s32 1, %s29
      %s39 = scalar_select %p36, %s38, %s29
      %p40 = scmp.ge.s32.totalorder %s39, 1
      %s41 = scalar_select %p40, 0, %s39
      %s42 = ssub.s32 %s30, %s37
      %s43 = ssub.s32 %s29, %s41
      %s44 = sor.u32 %s42, %s43
      %p45 = scmp.eq.s32.totalorder %s44, 0
      %s47 = sadd.s32 %s46, 1
      %s48 = scalar_select %p45, %s46, %s47
      %p51 = pneg %p45
      %p52 = scmp.eq.s32.totalorder %s22, 1
      %p53 = por %p51, %p52
      %p54 = scmp.ne.s32.totalorder %s46, %s49
      %p55 = scmp.eq.s32.totalorder %s22, 0
      %p56 = por %p54, %p55
      %p57 = scmp.ne.s32.totalorder %s46, %s49
      %p58 = scmp.eq.s32.totalorder %s27, 1
      %p59 = por %p57, %p58
      %p60 = scmp.ne.s32.totalorder %s49, %s50
      %p61 = scmp.eq.s32.totalorder %s27, 0
      %p62 = por %p60, %p61
      %p63 = scmp.ne.s32.totalorder %s49, %s50
      %p64 = scmp.eq.s32.totalorder %s28, 1
      %p65 = por %p63, %p64
      %p67 = scmp.ne.s32.totalorder %s50, %s66
      %p68 = scmp.eq.s32.totalorder %s28, 0
      %p69 = por %p67, %p68
      %s70 = ssub.s32 %s30, %s37
      %s71 = ssub.s32 %s29, %s41
      %s72 = sor.u32 %s70, %s71
      %p73 = scmp.eq.s32.totalorder %s72, 0
      %s75 = sadd.s32 %s74, 1
      %s76 = scalar_select %p73, %s74, %s75
      %p79 = pneg %p73
      %p80 = scmp.eq.s32.totalorder %s22, 1
      %p81 = por %p79, %p80
      %p82 = scmp.ne.s32.totalorder %s74, %s77
      %p83 = scmp.eq.s32.totalorder %s22, 0
      %p84 = por %p82, %p83
      %p85 = scmp.ne.s32.totalorder %s74, %s77
      %p86 = scmp.eq.s32.totalorder %s27, 1
      %p87 = por %p85, %p86
      %p88 = scmp.ne.s32.totalorder %s77, %s78
      %p89 = scmp.eq.s32.totalorder %s27, 0
      %p90 = por %p88, %p89
      %p91 = scmp.ne.s32.totalorder %s77, %s78
      %p92 = scmp.eq.s32.totalorder %s28, 1
      %p93 = por %p91, %p92
      %p95 = scmp.ne.s32.totalorder %s78, %s94
      %p96 = scmp.eq.s32.totalorder %s28, 0
      %p97 = por %p95, %p96
      %s98 = ssub.s32 %s29, %s41
      %p99 = scmp.eq.s32.totalorder %s98, 0
      %s101 = sadd.s32 %s100, 1
      %s102 = scalar_select %p99, %s100, %s101
      %p105 = pneg %p99
      %p106 = scmp.eq.s32.totalorder %s22, 1
      %p107 = por %p105, %p106
      %p108 = scmp.ne.s32.totalorder %s100, %s103
      %p109 = scmp.eq.s32.totalorder %s22, 0
      %p110 = por %p108, %p109
      %p111 = scmp.ne.s32.totalorder %s100, %s103
      %p112 = scmp.eq.s32.totalorder %s27, 1
      %p113 = por %p111, %p112
      %p114 = scmp.ne.s32.totalorder %s103, %s104
      %p115 = scmp.eq.s32.totalorder %s27, 0
      %p116 = por %p114, %p115
      %p117 = scmp.ne.s32.totalorder %s103, %s104
      %p118 = scmp.eq.s32.totalorder %s28, 1
      %p119 = por %p117, %p118
      %p121 = scmp.ne.s32.totalorder %s104, %s120
      %p122 = scmp.eq.s32.totalorder %s28, 0
      %p123 = por %p121, %p122
      %s125 = sadd.s32 %s124, 1
      %p128 = scmp.eq.s32.totalorder %s22, 1
      %p129 = scmp.ne.s32.totalorder %s124, %s126
      %p130 = scmp.eq.s32.totalorder %s22, 0
      %p131 = por %p129, %p130
      %p132 = scmp.ne.s32.totalorder %s124, %s126
      %p133 = scmp.eq.s32.totalorder %s27, 1
      %p134 = por %p132, %p133
      %p135 = scmp.ne.s32.totalorder %s126, %s127
      %p136 = scmp.eq.s32.totalorder %s27, 0
      %p137 = por %p135, %p136
      %p138 = scmp.ne.s32.totalorder %s126, %s127
      %p139 = scmp.eq.s32.totalorder %s28, 1
      %p140 = por %p138, %p139
      %p142 = scmp.ne.s32.totalorder %s127, %s141
      %p143 = scmp.eq.s32.totalorder %s28, 0
      %p144 = por %p142, %p143
      %s146 = sadd.s32 %s145, 1
      %p149 = scmp.eq.s32.totalorder %s22, 1
      %p150 = scmp.ne.s32.totalorder %s145, %s147
      %p151 = scmp.eq.s32.totalorder %s22, 0
      %p152 = por %p150, %p151
      %p153 = scmp.ne.s32.totalorder %s145, %s147
      %p154 = scmp.eq.s32.totalorder %s27, 1
      %p155 = por %p153, %p154
      %p156 = scmp.ne.s32.totalorder %s147, %s148
      %p157 = scmp.eq.s32.totalorder %s27, 0
      %p158 = por %p156, %p157
      %p159 = scmp.ne.s32.totalorder %s147, %s148
      %p160 = scmp.eq.s32.totalorder %s28, 1
      %p161 = por %p159, %p160
      %p163 = scmp.ne.s32.totalorder %s148, %s162
      %p164 = scmp.eq.s32.totalorder %s28, 0
      %p165 = por %p163, %p164
      %s167 = sadd.s32 %s166, 1
      %p170 = scmp.eq.s32.totalorder %s22, 1
      %p171 = scmp.ne.s32.totalorder %s166, %s168
      %p172 = scmp.eq.s32.totalorder %s22, 0
      %p173 = por %p171, %p172
      %p174 = scmp.ne.s32.totalorder %s166, %s168
      %p175 = scmp.eq.s32.totalorder %s27, 1
      %p176 = por %p174, %p175
      %p177 = scmp.ne.s32.totalorder %s168, %s169
      %p178 = scmp.eq.s32.totalorder %s27, 0
      %p179 = por %p177, %p178
      %p180 = scmp.ne.s32.totalorder %s168, %s169
      %p181 = scmp.eq.s32.totalorder %s28, 1
      %p182 = por %p180, %p181
      %p184 = scmp.ne.s32.totalorder %s169, %s183
      %p185 = scmp.eq.s32.totalorder %s28, 0
      %p186 = por %p184, %p185
      %s188 = sadd.s32 %s187, 1
      %p191 = scmp.eq.s32.totalorder %s22, 1
      %p192 = scmp.ne.s32.totalorder %s187, %s189
      %p193 = scmp.eq.s32.totalorder %s22, 0
      %p194 = por %p192, %p193
      %p195 = scmp.ne.s32.totalorder %s187, %s189
      %p196 = scmp.eq.s32.totalorder %s27, 1
      %p197 = por %p195, %p196
      %p198 = scmp.ne.s32.totalorder %s189, %s190
      %p199 = scmp.eq.s32.totalorder %s27, 0
      %p200 = por %p198, %p199
      %p201 = scmp.ne.s32.totalorder %s189, %s190
      %p202 = scmp.eq.s32.totalorder %s28, 1
      %p203 = por %p201, %p202
      %p205 = scmp.ne.s32.totalorder %s190, %s204
      %p206 = scmp.eq.s32.totalorder %s28, 0
      %p207 = por %p205, %p206
      %s208 = ssub.s32 %s29, %s41
      %p209 = scmp.eq.s32.totalorder %s208, 0
      %s211 = sadd.s32 %s210, 1
      %s212 = scalar_select %p209, %s210, %s211
      %p215 = pneg %p209
      %p216 = scmp.eq.s32.totalorder %s22, 1
      %p217 = por %p215, %p216
      %p218 = scmp.ne.s32.totalorder %s210, %s213
      %p219 = scmp.eq.s32.totalorder %s22, 0
      %p220 = por %p218, %p219
      %p221 = scmp.ne.s32.totalorder %s210, %s213
      %p222 = scmp.eq.s32.totalorder %s27, 1
      %p223 = por %p221, %p222
      %p224 = scmp.ne.s32.totalorder %s213, %s214
      %p225 = scmp.eq.s32.totalorder %s27, 0
      %p226 = por %p224, %p225
      %p227 = scmp.ne.s32.totalorder %s213, %s214
      %p228 = scmp.eq.s32.totalorder %s28, 1
      %p229 = por %p227, %p228
      %p231 = scmp.ne.s32.totalorder %s214, %s230
      %p232 = scmp.eq.s32.totalorder %s28, 0
      %p233 = por %p231, %p232
      %p234 = scmp.le.s32.totalorder 1, %s22
      %p235 = scmp.lt.s32.totalorder %s22, 3
      %p236 = pnand %p234, %p235
      %p237 = pneg %p236
      // Predicated region
      $region9: #{tpu_custom_call.1} parent=5 // pred_check
        _
      $region10: #{tpu_custom_call.1} parent=5 // pred_check_branch
        %239 = sbr.rel (%p236) target = $region12
      $region11: #{tpu_custom_call.1} parent=5 // pred_region
        %s240 = ssub.s32 %s22, 1
        // Predicated region
        $region13: #{tpu_custom_call.1} parent=11 // pred_check
          %p241 = pneg %p116
        $region14: #{tpu_custom_call.1} parent=11 // pred_check_branch
          %243 = sbr.rel (%p241) target = $region16
        $region15: #{tpu_custom_call.1} parent=11 // pred_region
          %p244 = scmp.lt.s32.totalorder %s31, 0
          %s245 = scalar_select %p244, %s31, 0
          %s246 = smul.addr %s245, 8
          %s247 = scalar_lea.vmem %s2, %s246
        $region16: #{tpu_custom_call.1} parent=11 // pred_fallthru
          _
        // Predicated region
        $region17: #{tpu_custom_call.1} parent=11 // pred_check
          %p248 = pneg %p137
        $region18: #{tpu_custom_call.1} parent=11 // pred_check_branch
          %250 = sbr.rel (%p248) target = $region20
        $region19: #{tpu_custom_call.1} parent=11 // pred_region
          _
        $region20: #{tpu_custom_call.1} parent=11 // pred_fallthru
          _
        // Predicated region
        $region21: #{tpu_custom_call.1} parent=11 // pred_check
          %p251 = pneg %p158
        $region22: #{tpu_custom_call.1} parent=11 // pred_check_branch
          %253 = sbr.rel (%p251) target = $region24
        $region23: #{tpu_custom_call.1} parent=11 // pred_region
          _
        $region24: #{tpu_custom_call.1} parent=11 // pred_fallthru
          _
        // Predicated region
        $region25: #{tpu_custom_call.1} parent=11 // pred_check
          %p254 = pneg %p179
        $region26: #{tpu_custom_call.1} parent=11 // pred_check_branch
          %256 = sbr.rel (%p254) target = $region28
        $region27: #{tpu_custom_call.1} parent=11 // pred_region
          %258 = vsyncadd [#allocation11], 0
          %s259 = sshll.u32 %s7, 4
          %s260 = int_to_ptr.hbm [resolvable:$true] %s259
          %s261 = sshll.u32 [#allocation12], 4
          %s262 = int_to_ptr.vmem [resolvable:$true] %s261
          %267 = dma.hbm_to_vmem [thread:$0]  %s260, 4096, %s262, [#allocation11], 128, 128, 8
        $region28: #{tpu_custom_call.1} parent=11 // pred_fallthru
          _
        // Predicated region
        $region29: #{tpu_custom_call.1} parent=11 // pred_check
          %p268 = pneg %p200
        $region30: #{tpu_custom_call.1} parent=11 // pred_check_branch
          %270 = sbr.rel (%p268) target = $region32
        $region31: #{tpu_custom_call.1} parent=11 // pred_region
          _
        $region32: #{tpu_custom_call.1} parent=11 // pred_fallthru
          _
      $region12: #{tpu_custom_call.1} parent=5 // pred_fallthru
        _
      %p271 = scmp.lt.s32.totalorder %s22, 2
      // Predicated region
      $region33: #{tpu_custom_call.1} parent=5 // pred_check
        %p272 = pneg %p271
      $region34: #{tpu_custom_call.1} parent=5 // pred_check_branch
        %274 = sbr.rel (%p272) target = $region36
      $region35: #{tpu_custom_call.1} parent=5 // pred_region
        // Predicated region
        $region37: #{tpu_custom_call.1} parent=35 // pred_check
          %p275 = pneg %p56
        $region38: #{tpu_custom_call.1} parent=35 // pred_check_branch
          %277 = sbr.rel (%p275) target = $region40
        $region39: #{tpu_custom_call.1} parent=35 // pred_region
          %s278 = sand.u32 %s46, 1
          %s279 = scalar_lea.sflag [#allocation8], %s278
          %s280 = sand.u32 %s46, 1
          %s281 = smul.addr %s280, 32
          %s282 = scalar_lea.vmem [#allocation7], %s281
          %s283 = smul.u32 4, %s30
          %285 = vsyncadd %s279, 0
          %s286 = sadd.s32 %s29, %s283
          %s287 = smul.addr %s286, 8
          %s288 = scalar_lea.hbm %s0, %s287
          %s289 = sshll.u32 %s288, 4
          %s290 = int_to_ptr.hbm [resolvable:$true] %s289
          %s291 = sshll.u32 %s282, 4
          %s292 = int_to_ptr.vmem [resolvable:$true] %s291
          %297 = dma.hbm_to_vmem [thread:$0]  %s290, 512, %s292, %s279, 128, 128, 8
        $region40: #{tpu_custom_call.1} parent=35 // pred_fallthru
          _
        // Predicated region
        $region41: #{tpu_custom_call.1} parent=35 // pred_check
          %p298 = pneg %p84
        $region42: #{tpu_custom_call.1} parent=35 // pred_check_branch
          %300 = sbr.rel (%p298) target = $region44
        $region43: #{tpu_custom_call.1} parent=35 // pred_region
          %s301 = sand.u32 %s22, 1
          %s302 = scalar_lea.sflag [#allocation11], %s301
          %s303 = sand.u32 %s74, 1
          %s304 = smul.addr %s303, 32
          %s305 = scalar_lea.vmem [#allocation10], %s304
          %s306 = smul.u32 4, %s30
          %308 = vsyncadd %s302, 0
          %s309 = sadd.s32 %s29, %s306
          %s310 = smul.addr %s309, 8
          %s311 = scalar_lea.hbm %s1, %s310
          %s312 = sshll.u32 %s311, 4
          %s313 = int_to_ptr.hbm [resolvable:$true] %s312
          %s314 = sshll.u32 %s305, 4
          %s315 = int_to_ptr.vmem [resolvable:$true] %s314
          %320 = dma.hbm_to_vmem [thread:$0]  %s313, 512, %s315, %s302, 128, 128, 8
        $region44: #{tpu_custom_call.1} parent=35 // pred_fallthru
          _
      $region36: #{tpu_custom_call.1} parent=5 // pred_fallthru
        _
      %p321 = scmp.le.s32.totalorder 1, %s22
      %p322 = scmp.lt.s32.totalorder %s22, 3
      %p323 = pnand %p321, %p322
      %p324 = pneg %p323
      // Predicated region
      $region45: #{tpu_custom_call.1} parent=5 // pred_check
        _
      $region46: #{tpu_custom_call.1} parent=5 // pred_check_branch
        %326 = sbr.rel (%p323) target = $region48
      $region47: #{tpu_custom_call.1} parent=5 // pred_region
        %s327 = ssub.s32 %s22, 1
        %s328 = sand.u32 %s49, 1
        %s329 = scalar_lea.sflag [#allocation8], %s328
        %s330 = sand.u32 %s49, 1
        %s331 = smul.addr %s330, 32
        %s332 = scalar_lea.vmem [#allocation7], %s331
        // Predicated region
        $region49: #{tpu_custom_call.1} parent=47 // pred_check
          %p333 = pneg %p62
        $region50: #{tpu_custom_call.1} parent=47 // pred_check_branch
          %335 = sbr.rel (%p333) target = $region52
        $region51: #{tpu_custom_call.1} parent=47 // pred_region
          %337 = dma.done %s329, 512
        $region52: #{tpu_custom_call.1} parent=47 // pred_fallthru
          _
        %s338 = sand.u32 %s27, 1
        %s339 = scalar_lea.sflag [#allocation11], %s338
        %s340 = sand.u32 %s77, 1
        %s341 = smul.addr %s340, 32
        %s342 = scalar_lea.vmem [#allocation10], %s341
        // Predicated region
        $region53: #{tpu_custom_call.1} parent=47 // pred_check
          %p343 = pneg %p90
        $region54: #{tpu_custom_call.1} parent=47 // pred_check_branch
          %345 = sbr.rel (%p343) target = $region56
        $region55: #{tpu_custom_call.1} parent=47 // pred_region
          %347 = dma.done %s339, 512
        $region56: #{tpu_custom_call.1} parent=47 // pred_fallthru
          _
        // Predicated region
        $region57: #{tpu_custom_call.1} parent=47 // pred_check
          %p348 = pneg %p179
        $region58: #{tpu_custom_call.1} parent=47 // pred_check_branch
          %350 = sbr.rel (%p348) target = $region60
        $region59: #{tpu_custom_call.1} parent=47 // pred_region
          %352 = dma.done [#allocation11], 4096
        $region60: #{tpu_custom_call.1} parent=47 // pred_fallthru
          _
        %s353 = sand.u32 %s49, 1
        %s354 = scalar_lea.sflag [#allocation8], %s353
        %s355 = sand.u32 %s49, 1
        %s356 = smul.addr %s355, 32
        %s357 = scalar_lea.vmem [#allocation7], %s356
        %p358 = pneg %p62
        %p359 = pneg %p59
        %s360 = sand.u32 %s27, 1
        %s361 = scalar_lea.sflag [#allocation11], %s360
        %s362 = sand.u32 %s77, 1
        %s363 = smul.addr %s362, 32
        %s364 = scalar_lea.vmem [#allocation10], %s363
        %p365 = pneg %p90
        %p366 = pneg %p87
        %p367 = scmp.lt.s32.totalorder %s31, 0
        %s368 = scalar_select %p367, %s31, 0
        %s369 = smul.addr %s368, 8
        %s370 = scalar_lea.vmem %s2, %s369
        %p371 = pneg %p116
        %p372 = pneg %p113
        %p373 = pneg %p137
        %p374 = pneg %p134
        %p375 = pneg %p158
        %p376 = pneg %p155
        %p377 = pneg %p179
        %p378 = pneg %p176
        %p379 = pneg %p200
        %p380 = pneg %p197
        %p381 = pneg %p226
        %p382 = pneg %p223
        %s383 = smul.u32 4, %s32
        %s384 = smul.u32 4, %s32
        %p385 = scmp.lt.s32.totalorder %s31, 0
        %s386 = scalar_select %p385, %s31, 0
        %s387 = smul.addr %s386, 8
        %s388 = scalar_lea.vmem %s2, %s387
        %p389 = scmp.eq.s32.totalorder %s32, 0
        // Predicated region
        $region61: #{tpu_custom_call.1} parent=47 // pred_check
          %p390 = pneg %p389
        $region62: #{tpu_custom_call.1} parent=47 // pred_check_branch
          %392 = sbr.rel (%p390) target = $region64
        $region63: #{tpu_custom_call.1} parent=47 // pred_region
          // Predicated region
          $region65: #{tpu_custom_call.1} parent=63 // pred_check
            _
          $region66: #{tpu_custom_call.1} parent=63 // pred_check_branch
            %394 = sbr.rel target = $region68
          $region67: #{tpu_custom_call.1} parent=63 // pred_region
            %395 = sst [smem:[#allocation16]] [#allocation15]
            %396 = sst [smem:[#allocation17]] [#allocation14]
          $region68: #{tpu_custom_call.1} parent=63 // pred_fallthru
            _
          %398 = shalt.err (0)
          %s400 = sshll.u32 %s3, 4
          %s401 = int_to_ptr.hbm [resolvable:$true] %s400
          %s402 = sshll.u32 [#allocation2], 4
          %s403 = int_to_ptr.vmem [resolvable:$true] %s402
          %405 = dma.hbm_to_vmem [thread:$0]  %s401, 12288, %s403, [#allocation6]
          %s406 = scalar_lea.sflag [#allocation6], 1
          // Predicated region
          $region69: #{tpu_custom_call.1} parent=63 // pred_check
            _
          $region70: #{tpu_custom_call.1} parent=63 // pred_check_branch
            %408 = sbr.rel target = $region72
          $region71: #{tpu_custom_call.1} parent=63 // pred_region
            %409 = sst [smem:[#allocation16]] [#allocation19]
            %410 = sst [smem:[#allocation17]] [#allocation18]
          $region72: #{tpu_custom_call.1} parent=63 // pred_fallthru
            _
          %412 = shalt.err (0)
          %s414 = sshll.u32 %s4, 4
          %s415 = int_to_ptr.hbm [resolvable:$true] %s414
          %s416 = sshll.u32 [#allocation3], 4
          %s417 = int_to_ptr.vmem [resolvable:$true] %s416
          %419 = dma.hbm_to_vmem [thread:$0]  %s415, 12288, %s417, %s406
          %s420 = smul.u32 8, 2
          %s421 = smul.u32 %s420, 16
          %s422 = smul.u32 %s421, 3
          %s423 = sshll.u32 %s422, 4
          %424 = dma.done [#allocation6], %s423
          %s425 = sshll.u32 %s422, 4
          %426 = dma.done %s406, %s425
          %427 = vst [vmem:[#allocation5] sm:$0xff] 0.0
          %428 = vst [vmem:[#allocation5 + $0x8] sm:$0xff] 0.0
        $region64: #{tpu_custom_call.1} parent=47 // pred_fallthru
          _
        %v429 = vld [vmem:[#allocation2] sm:$0xff]
        %v430 = vld [vmem:[#allocation2 + $0x8] sm:$0xff]
        %v431 = vld [vmem:[#allocation2 + $0x10] sm:$0xff]
        %v432 = vld [vmem:[#allocation2 + $0x18] sm:$0xff]
        %v433 = vld [vmem:[#allocation2 + $0x20] sm:$0xff]
        %v434 = vld [vmem:[#allocation2 + $0x28] sm:$0xff]
        %v435 = vld [vmem:[#allocation2 + $0x30] sm:$0xff]
        %v436 = vld [vmem:[#allocation2 + $0x38] sm:$0xff]
        %v437 = vld [vmem:[#allocation2 + $0x40] sm:$0xff]
        %v438 = vld [vmem:[#allocation2 + $0x48] sm:$0xff]
        %v439 = vld [vmem:[#allocation2 + $0x50] sm:$0xff]
        %v440 = vld [vmem:[#allocation2 + $0x58] sm:$0xff]
        %v441 = vld [vmem:[#allocation2 + $0x60] sm:$0xff]
        %v442 = vld [vmem:[#allocation2 + $0x68] sm:$0xff]
        %v443 = vld [vmem:[#allocation2 + $0x70] sm:$0xff]
        %v444 = vld [vmem:[#allocation2 + $0x78] sm:$0xff]
        %v445 = vld [vmem:[#allocation2 + $0x80] sm:$0xff]
        %v446 = vld [vmem:[#allocation2 + $0x88] sm:$0xff]
        %v447 = vld [vmem:[#allocation2 + $0x90] sm:$0xff]
        %v448 = vld [vmem:[#allocation2 + $0x98] sm:$0xff]
        %v449 = vld [vmem:[#allocation2 + $0xa0] sm:$0xff]
        %v450 = vld [vmem:[#allocation2 + $0xa8] sm:$0xff]
        %v451 = vld [vmem:[#allocation2 + $0xb0] sm:$0xff]
        %v452 = vld [vmem:[#allocation2 + $0xb8] sm:$0xff]
        %v453 = vld [vmem:[#allocation2 + $0xc0] sm:$0xff]
        %v454 = vld [vmem:[#allocation2 + $0xc8] sm:$0xff]
        %v455 = vld [vmem:[#allocation2 + $0xd0] sm:$0xff]
        %v456 = vld [vmem:[#allocation2 + $0xd8] sm:$0xff]
        %v457 = vld [vmem:[#allocation2 + $0xe0] sm:$0xff]
        %v458 = vld [vmem:[#allocation2 + $0xe8] sm:$0xff]
        %v459 = vld [vmem:[#allocation2 + $0xf0] sm:$0xff]
        %v460 = vld [vmem:[#allocation2 + $0xf8] sm:$0xff]
        %v461 = vld [vmem:[#allocation2 + $0x100] sm:$0xff]
        %v462 = vld [vmem:[#allocation2 + $0x108] sm:$0xff]
        %v463 = vld [vmem:[#allocation2 + $0x110] sm:$0xff]
        %v464 = vld [vmem:[#allocation2 + $0x118] sm:$0xff]
        %v465 = vld [vmem:[#allocation2 + $0x120] sm:$0xff]
        %v466 = vld [vmem:[#allocation2 + $0x128] sm:$0xff]
        %v467 = vld [vmem:[#allocation2 + $0x130] sm:$0xff]
        %v468 = vld [vmem:[#allocation2 + $0x138] sm:$0xff]
        %v469 = vld [vmem:[#allocation2 + $0x140] sm:$0xff]
        %v470 = vld [vmem:[#allocation2 + $0x148] sm:$0xff]
        %v471 = vld [vmem:[#allocation2 + $0x150] sm:$0xff]
        %v472 = vld [vmem:[#allocation2 + $0x158] sm:$0xff]
        %v473 = vld [vmem:[#allocation2 + $0x160] sm:$0xff]
        %v474 = vld [vmem:[#allocation2 + $0x168] sm:$0xff]
        %v475 = vld [vmem:[#allocation2 + $0x170] sm:$0xff]
        %v476 = vld [vmem:[#allocation2 + $0x178] sm:$0xff]
        %v477 = vld [vmem:[#allocation2 + $0x180] sm:$0xff]
        %v478 = vld [vmem:[#allocation2 + $0x188] sm:$0xff]
        %v479 = vld [vmem:[#allocation2 + $0x190] sm:$0xff]
        %v480 = vld [vmem:[#allocation2 + $0x198] sm:$0xff]
        %v481 = vld [vmem:[#allocation2 + $0x1a0] sm:$0xff]
        %v482 = vld [vmem:[#allocation2 + $0x1a8] sm:$0xff]
        %v483 = vld [vmem:[#allocation2 + $0x1b0] sm:$0xff]
        %v484 = vld [vmem:[#allocation2 + $0x1b8] sm:$0xff]
        %v485 = vld [vmem:[#allocation2 + $0x1c0] sm:$0xff]
        %v486 = vld [vmem:[#allocation2 + $0x1c8] sm:$0xff]
        %v487 = vld [vmem:[#allocation2 + $0x1d0] sm:$0xff]
        %v488 = vld [vmem:[#allocation2 + $0x1d8] sm:$0xff]
        %v489 = vld [vmem:[#allocation2 + $0x1e0] sm:$0xff]
        %v490 = vld [vmem:[#allocation2 + $0x1e8] sm:$0xff]
        %v491 = vld [vmem:[#allocation2 + $0x1f0] sm:$0xff]
        %v492 = vld [vmem:[#allocation2 + $0x1f8] sm:$0xff]
        %v493 = vld [vmem:[#allocation2 + $0x200] sm:$0xff]
        %v494 = vld [vmem:[#allocation2 + $0x208] sm:$0xff]
        %v495 = vld [vmem:[#allocation2 + $0x210] sm:$0xff]
        %v496 = vld [vmem:[#allocation2 + $0x218] sm:$0xff]
        %v497 = vld [vmem:[#allocation2 + $0x220] sm:$0xff]
        %v498 = vld [vmem:[#allocation2 + $0x228] sm:$0xff]
        %v499 = vld [vmem:[#allocation2 + $0x230] sm:$0xff]
        %v500 = vld [vmem:[#allocation2 + $0x238] sm:$0xff]
        %v501 = vld [vmem:[#allocation2 + $0x240] sm:$0xff]
        %v502 = vld [vmem:[#allocation2 + $0x248] sm:$0xff]
        %v503 = vld [vmem:[#allocation2 + $0x250] sm:$0xff]
        %v504 = vld [vmem:[#allocation2 + $0x258] sm:$0xff]
        %v505 = vld [vmem:[#allocation2 + $0x260] sm:$0xff]
        %v506 = vld [vmem:[#allocation2 + $0x268] sm:$0xff]
        %v507 = vld [vmem:[#allocation2 + $0x270] sm:$0xff]
        %v508 = vld [vmem:[#allocation2 + $0x278] sm:$0xff]
        %v509 = vld [vmem:[#allocation2 + $0x280] sm:$0xff]
        %v510 = vld [vmem:[#allocation2 + $0x288] sm:$0xff]
        %v511 = vld [vmem:[#allocation2 + $0x290] sm:$0xff]
        %v512 = vld [vmem:[#allocation2 + $0x298] sm:$0xff]
        %v513 = vld [vmem:[#allocation2 + $0x2a0] sm:$0xff]
        %v514 = vld [vmem:[#allocation2 + $0x2a8] sm:$0xff]
        %v515 = vld [vmem:[#allocation2 + $0x2b0] sm:$0xff]
        %v516 = vld [vmem:[#allocation2 + $0x2b8] sm:$0xff]
        %v517 = vld [vmem:[#allocation2 + $0x2c0] sm:$0xff]
        %v518 = vld [vmem:[#allocation2 + $0x2c8] sm:$0xff]
        %v519 = vld [vmem:[#allocation2 + $0x2d0] sm:$0xff]
        %v520 = vld [vmem:[#allocation2 + $0x2d8] sm:$0xff]
        %v521 = vld [vmem:[#allocation2 + $0x2e0] sm:$0xff]
        %v522 = vld [vmem:[#allocation2 + $0x2e8] sm:$0xff]
        %v523 = vld [vmem:[#allocation2 + $0x2f0] sm:$0xff]
        %v524 = vld [vmem:[#allocation2 + $0x2f8] sm:$0xff]
        %v525 = vld [vmem:[%s332] sm:$0xff]
        %v526 = vld [vmem:[%s332 + $0x8] sm:$0xff]
        %v527 = vld [vmem:[%s332 + $0x10] sm:$0xff]
        %v528 = vld [vmem:[%s332 + $0x18] sm:$0xff]
        %v529 = vld [vmem:[%s342] sm:$0xff]
        %v530 = vld [vmem:[%s342 + $0x8] sm:$0xff]
        %v531 = vld [vmem:[%s342 + $0x10] sm:$0xff]
        %v532 = vld [vmem:[%s342 + $0x18] sm:$0xff]
        %v533 = vld [vmem:[%s5] sm:$0x7]
        %v535 = vperm.slane %v533, 0
        %v536 = vperm.slane %v533, 1
        %v537 = vperm.slane %v533, 2
        %541 = vmatpush.msra.mxu0 %v474
        %542 = vmatpush.msra.mxu0 %v471
        %543 = vmatpush.msra.mxu0 %v468
        %544 = vmatpush.msra.mxu0 %v465
        %545 = vmatpush.msra.mxu0 %v462
        %546 = vmatpush.msra.mxu0 %v459
        %547 = vmatpush.msra.mxu0 %v456
        %548 = vmatpush.msra.mxu0 %v453
        %549 = vmatpush.msra.mxu0 %v450
        %550 = vmatpush.msra.mxu0 %v447
        %551 = vmatpush.msra.mxu0 %v444
        %552 = vmatpush.msra.mxu0 %v441
        %553 = vmatpush.msra.mxu0 %v438
        %554 = vmatpush.msra.mxu0 %v435
        %555 = vmatpush.msra.mxu0 %v432
        %556 = vmatpush.msra.mxu0 %v429
        %557 = vmatmul.f32.gmra.mxu0 %v525
        %v558 = vpop.f32.mrf.mxu0
        %v559 = vadd.f32 %v535, %v558
        %560 = vmatmul.f32.gmra.mxu0 %v526
        %v561 = vpop.f32.mrf.mxu0
        %v562 = vadd.f32 %v535, %v561
        %563 = vmatmul.f32.gmra.mxu0 %v527
        %v564 = vpop.f32.mrf.mxu0
        %v565 = vadd.f32 %v535, %v564
        %566 = vmatmul.f32.gmra.mxu0 %v528
        %v567 = vpop.f32.mrf.mxu0
        %v568 = vadd.f32 %v535, %v567
        %569 = vdwg.mxu0
        %570 = vmatpush.msra.mxu0 %v475
        %571 = vmatpush.msra.mxu0 %v472
        %572 = vmatpush.msra.mxu0 %v469
        %573 = vmatpush.msra.mxu0 %v466
        %574 = vmatpush.msra.mxu0 %v463
        %575 = vmatpush.msra.mxu0 %v460
        %576 = vmatpush.msra.mxu0 %v457
        %577 = vmatpush.msra.mxu0 %v454
        %578 = vmatpush.msra.mxu0 %v451
        %579 = vmatpush.msra.mxu0 %v448
        %580 = vmatpush.msra.mxu0 %v445
        %581 = vmatpush.msra.mxu0 %v442
        %582 = vmatpush.msra.mxu0 %v439
        %583 = vmatpush.msra.mxu0 %v436
        %584 = vmatpush.msra.mxu0 %v433
        %585 = vmatpush.msra.mxu0 %v430
        %586 = vmatmul.f32.gmra.mxu0 %v525
        %v587 = vpop.f32.mrf.mxu0
        %v588 = vadd.f32 %v536, %v587
        %589 = vmatmul.f32.gmra.mxu0 %v526
        %v590 = vpop.f32.mrf.mxu0
        %v591 = vadd.f32 %v536, %v590
        %592 = vmatmul.f32.gmra.mxu0 %v527
        %v593 = vpop.f32.mrf.mxu0
        %v594 = vadd.f32 %v536, %v593
        %595 = vmatmul.f32.gmra.mxu0 %v528
        %v596 = vpop.f32.mrf.mxu0
        %v597 = vadd.f32 %v536, %v596
        %598 = vdwg.mxu0
        %599 = vmatpush.msra.mxu0 %v476
        %600 = vmatpush.msra.mxu0 %v473
        %601 = vmatpush.msra.mxu0 %v470
        %602 = vmatpush.msra.mxu0 %v467
        %603 = vmatpush.msra.mxu0 %v464
        %604 = vmatpush.msra.mxu0 %v461
        %605 = vmatpush.msra.mxu0 %v458
        %606 = vmatpush.msra.mxu0 %v455
        %607 = vmatpush.msra.mxu0 %v452
        %608 = vmatpush.msra.mxu0 %v449
        %609 = vmatpush.msra.mxu0 %v446
        %610 = vmatpush.msra.mxu0 %v443
        %611 = vmatpush.msra.mxu0 %v440
        %612 = vmatpush.msra.mxu0 %v437
        %613 = vmatpush.msra.mxu0 %v434
        %614 = vmatpush.msra.mxu0 %v431
        %615 = vmatmul.f32.gmra.mxu0 %v525
        %v616 = vpop.f32.mrf.mxu0
        %v617 = vadd.f32 %v537, %v616
        %618 = vmatmul.f32.gmra.mxu0 %v526
        %v619 = vpop.f32.mrf.mxu0
        %v620 = vadd.f32 %v537, %v619
        %621 = vmatmul.f32.gmra.mxu0 %v527
        %v622 = vpop.f32.mrf.mxu0
        %v623 = vadd.f32 %v537, %v622
        %624 = vmatmul.f32.gmra.mxu0 %v528
        %v625 = vpop.f32.mrf.mxu0
        %v626 = vadd.f32 %v537, %v625
        %627 = vdwg.mxu0
        %628 = vst [vmem:[#allocation4] sm:$0xff] %v559
        %629 = vst [vmem:[#allocation4 + $0x8] sm:$0xff] %v588
        %630 = vst [vmem:[#allocation4 + $0x10] sm:$0xff] %v617
        %631 = vst [vmem:[#allocation4 + $0x18] sm:$0xff] %v562
        %632 = vst [vmem:[#allocation4 + $0x20] sm:$0xff] %v591
        %633 = vst [vmem:[#allocation4 + $0x28] sm:$0xff] %v620
        %634 = vst [vmem:[#allocation4 + $0x30] sm:$0xff] %v565
        %635 = vst [vmem:[#allocation4 + $0x38] sm:$0xff] %v594
        %636 = vst [vmem:[#allocation4 + $0x40] sm:$0xff] %v623
        %637 = vst [vmem:[#allocation4 + $0x48] sm:$0xff] %v568
        %638 = vst [vmem:[#allocation4 + $0x50] sm:$0xff] %v597
        %639 = vst [vmem:[#allocation4 + $0x58] sm:$0xff] %v626
        %s640 = scalar_lea.vmem %s5, 3
        %v641 = vld [vmem:[%s640] sm:$0x7]
        %v643 = vperm.slane %v641, 0
        %v644 = vperm.slane %v641, 1
        %v645 = vperm.slane %v641, 2
        %649 = vmatpush.msra.mxu0 %v522
        %650 = vmatpush.msra.mxu0 %v519
        %651 = vmatpush.msra.mxu0 %v516
        %652 = vmatpush.msra.mxu0 %v513
        %653 = vmatpush.msra.mxu0 %v510
        %654 = vmatpush.msra.mxu0 %v507
        %655 = vmatpush.msra.mxu0 %v504
        %656 = vmatpush.msra.mxu0 %v501
        %657 = vmatpush.msra.mxu0 %v498
        %658 = vmatpush.msra.mxu0 %v495
        %659 = vmatpush.msra.mxu0 %v492
        %660 = vmatpush.msra.mxu0 %v489
        %661 = vmatpush.msra.mxu0 %v486
        %662 = vmatpush.msra.mxu0 %v483
        %663 = vmatpush.msra.mxu0 %v480
        %664 = vmatpush.msra.mxu0 %v477
        %665 = vmatmul.f32.gmra.mxu0 %v529
        %v666 = vpop.f32.mrf.mxu0
        %v667 = vadd.f32 %v643, %v666
        %668 = vmatmul.f32.gmra.mxu0 %v530
        %v669 = vpop.f32.mrf.mxu0
        %v670 = vadd.f32 %v643, %v669
        %671 = vmatmul.f32.gmra.mxu0 %v531
        %v672 = vpop.f32.mrf.mxu0
        %v673 = vadd.f32 %v643, %v672
        %674 = vmatmul.f32.gmra.mxu0 %v532
        %v675 = vpop.f32.mrf.mxu0
        %v676 = vadd.f32 %v643, %v675
        %677 = vdwg.mxu0
        %678 = vmatpush.msra.mxu0 %v523
        %679 = vmatpush.msra.mxu0 %v520
        %680 = vmatpush.msra.mxu0 %v517
        %681 = vmatpush.msra.mxu0 %v514
        %682 = vmatpush.msra.mxu0 %v511
        %683 = vmatpush.msra.mxu0 %v508
        %684 = vmatpush.msra.mxu0 %v505
        %685 = vmatpush.msra.mxu0 %v502
        %686 = vmatpush.msra.mxu0 %v499
        %687 = vmatpush.msra.mxu0 %v496
        %688 = vmatpush.msra.mxu0 %v493
        %689 = vmatpush.msra.mxu0 %v490
        %690 = vmatpush.msra.mxu0 %v487
        %691 = vmatpush.msra.mxu0 %v484
        %692 = vmatpush.msra.mxu0 %v481
        %693 = vmatpush.msra.mxu0 %v478
        %694 = vmatmul.f32.gmra.mxu0 %v529
        %v695 = vpop.f32.mrf.mxu0
        %v696 = vadd.f32 %v644, %v695
        %697 = vmatmul.f32.gmra.mxu0 %v530
        %v698 = vpop.f32.mrf.mxu0
        %v699 = vadd.f32 %v644, %v698
        %700 = vmatmul.f32.gmra.mxu0 %v531
        %v701 = vpop.f32.mrf.mxu0
        %v702 = vadd.f32 %v644, %v701
        %703 = vmatmul.f32.gmra.mxu0 %v532
        %v704 = vpop.f32.mrf.mxu0
        %v705 = vadd.f32 %v644, %v704
        %706 = vdwg.mxu0
        %707 = vmatpush.msra.mxu0 %v524
        %708 = vmatpush.msra.mxu0 %v521
        %709 = vmatpush.msra.mxu0 %v518
        %710 = vmatpush.msra.mxu0 %v515
        %711 = vmatpush.msra.mxu0 %v512
        %712 = vmatpush.msra.mxu0 %v509
        %713 = vmatpush.msra.mxu0 %v506
        %714 = vmatpush.msra.mxu0 %v503
        %715 = vmatpush.msra.mxu0 %v500
        %716 = vmatpush.msra.mxu0 %v497
        %717 = vmatpush.msra.mxu0 %v494
        %718 = vmatpush.msra.mxu0 %v491
        %719 = vmatpush.msra.mxu0 %v488
        %720 = vmatpush.msra.mxu0 %v485
        %721 = vmatpush.msra.mxu0 %v482
        %722 = vmatpush.msra.mxu0 %v479
        %723 = vmatmul.f32.gmra.mxu0 %v529
        %v724 = vpop.f32.mrf.mxu0
        %v725 = vadd.f32 %v645, %v724
        %726 = vmatmul.f32.gmra.mxu0 %v530
        %v727 = vpop.f32.mrf.mxu0
        %v728 = vadd.f32 %v645, %v727
        %729 = vmatmul.f32.gmra.mxu0 %v531
        %v730 = vpop.f32.mrf.mxu0
        %v731 = vadd.f32 %v645, %v730
        %732 = vmatmul.f32.gmra.mxu0 %v532
        %v733 = vpop.f32.mrf.mxu0
        %v734 = vadd.f32 %v645, %v733
        %735 = vdwg.mxu0
        %s736 = scalar_lea.vmem [#allocation4], 96
        %737 = vst [vmem:[%s736] sm:$0xff] %v667
        %738 = vst [vmem:[%s736 + $0x8] sm:$0xff] %v696
        %739 = vst [vmem:[%s736 + $0x10] sm:$0xff] %v725
        %740 = vst [vmem:[%s736 + $0x18] sm:$0xff] %v670
        %741 = vst [vmem:[%s736 + $0x20] sm:$0xff] %v699
        %742 = vst [vmem:[%s736 + $0x28] sm:$0xff] %v728
        %743 = vst [vmem:[%s736 + $0x30] sm:$0xff] %v673
        %744 = vst [vmem:[%s736 + $0x38] sm:$0xff] %v702
        %745 = vst [vmem:[%s736 + $0x40] sm:$0xff] %v731
        %746 = vst [vmem:[%s736 + $0x48] sm:$0xff] %v676
        %747 = vst [vmem:[%s736 + $0x50] sm:$0xff] %v705
        %748 = vst [vmem:[%s736 + $0x58] sm:$0xff] %v734
        %v749 = vld [vmem:[#allocation3] sm:$0xff]
        %v750 = vld [vmem:[#allocation3 + $0x8] sm:$0xff]
        %v751 = vld [vmem:[#allocation3 + $0x10] sm:$0xff]
        %v752 = vld [vmem:[#allocation3 + $0x18] sm:$0xff]
        %v753 = vld [vmem:[#allocation3 + $0x20] sm:$0xff]
        %v754 = vld [vmem:[#allocation3 + $0x28] sm:$0xff]
        %v755 = vld [vmem:[#allocation3 + $0x30] sm:$0xff]
        %v756 = vld [vmem:[#allocation3 + $0x38] sm:$0xff]
        %v757 = vld [vmem:[#allocation3 + $0x40] sm:$0xff]
        %v758 = vld [vmem:[#allocation3 + $0x48] sm:$0xff]
        %v759 = vld [vmem:[#allocation3 + $0x50] sm:$0xff]
        %v760 = vld [vmem:[#allocation3 + $0x58] sm:$0xff]
        %v761 = vld [vmem:[#allocation3 + $0x60] sm:$0xff]
        %v762 = vld [vmem:[#allocation3 + $0x68] sm:$0xff]
        %v763 = vld [vmem:[#allocation3 + $0x70] sm:$0xff]
        %v764 = vld [vmem:[#allocation3 + $0x78] sm:$0xff]
        %v765 = vld [vmem:[#allocation3 + $0x80] sm:$0xff]
        %v766 = vld [vmem:[#allocation3 + $0x88] sm:$0xff]
        %v767 = vld [vmem:[#allocation3 + $0x90] sm:$0xff]
        %v768 = vld [vmem:[#allocation3 + $0x98] sm:$0xff]
        %v769 = vld [vmem:[#allocation3 + $0xa0] sm:$0xff]
        %v770 = vld [vmem:[#allocation3 + $0xa8] sm:$0xff]
        %v771 = vld [vmem:[#allocation3 + $0xb0] sm:$0xff]
        %v772 = vld [vmem:[#allocation3 + $0xb8] sm:$0xff]
        %v773 = vld [vmem:[#allocation3 + $0xc0] sm:$0xff]
        %v774 = vld [vmem:[#allocation3 + $0xc8] sm:$0xff]
        %v775 = vld [vmem:[#allocation3 + $0xd0] sm:$0xff]
        %v776 = vld [vmem:[#allocation3 + $0xd8] sm:$0xff]
        %v777 = vld [vmem:[#allocation3 + $0xe0] sm:$0xff]
        %v778 = vld [vmem:[#allocation3 + $0xe8] sm:$0xff]
        %v779 = vld [vmem:[#allocation3 + $0xf0] sm:$0xff]
        %v780 = vld [vmem:[#allocation3 + $0xf8] sm:$0xff]
        %v781 = vld [vmem:[#allocation3 + $0x100] sm:$0xff]
        %v782 = vld [vmem:[#allocation3 + $0x108] sm:$0xff]
        %v783 = vld [vmem:[#allocation3 + $0x110] sm:$0xff]
        %v784 = vld [vmem:[#allocation3 + $0x118] sm:$0xff]
        %v785 = vld [vmem:[#allocation3 + $0x120] sm:$0xff]
        %v786 = vld [vmem:[#allocation3 + $0x128] sm:$0xff]
        %v787 = vld [vmem:[#allocation3 + $0x130] sm:$0xff]
        %v788 = vld [vmem:[#allocation3 + $0x138] sm:$0xff]
        %v789 = vld [vmem:[#allocation3 + $0x140] sm:$0xff]
        %v790 = vld [vmem:[#allocation3 + $0x148] sm:$0xff]
        %v791 = vld [vmem:[#allocation3 + $0x150] sm:$0xff]
        %v792 = vld [vmem:[#allocation3 + $0x158] sm:$0xff]
        %v793 = vld [vmem:[#allocation3 + $0x160] sm:$0xff]
        %v794 = vld [vmem:[#allocation3 + $0x168] sm:$0xff]
        %v795 = vld [vmem:[#allocation3 + $0x170] sm:$0xff]
        %v796 = vld [vmem:[#allocation3 + $0x178] sm:$0xff]
        %v797 = vld [vmem:[#allocation3 + $0x180] sm:$0xff]
        %v798 = vld [vmem:[#allocation3 + $0x188] sm:$0xff]
        %v799 = vld [vmem:[#allocation3 + $0x190] sm:$0xff]
        %v800 = vld [vmem:[#allocation3 + $0x198] sm:$0xff]
        %v801 = vld [vmem:[#allocation3 + $0x1a0] sm:$0xff]
        %v802 = vld [vmem:[#allocation3 + $0x1a8] sm:$0xff]
        %v803 = vld [vmem:[#allocation3 + $0x1b0] sm:$0xff]
        %v804 = vld [vmem:[#allocation3 + $0x1b8] sm:$0xff]
        %v805 = vld [vmem:[#allocation3 + $0x1c0] sm:$0xff]
        %v806 = vld [vmem:[#allocation3 + $0x1c8] sm:$0xff]
        %v807 = vld [vmem:[#allocation3 + $0x1d0] sm:$0xff]
        %v808 = vld [vmem:[#allocation3 + $0x1d8] sm:$0xff]
        %v809 = vld [vmem:[#allocation3 + $0x1e0] sm:$0xff]
        %v810 = vld [vmem:[#allocation3 + $0x1e8] sm:$0xff]
        %v811 = vld [vmem:[#allocation3 + $0x1f0] sm:$0xff]
        %v812 = vld [vmem:[#allocation3 + $0x1f8] sm:$0xff]
        %v813 = vld [vmem:[#allocation3 + $0x200] sm:$0xff]
        %v814 = vld [vmem:[#allocation3 + $0x208] sm:$0xff]
        %v815 = vld [vmem:[#allocation3 + $0x210] sm:$0xff]
        %v816 = vld [vmem:[#allocation3 + $0x218] sm:$0xff]
        %v817 = vld [vmem:[#allocation3 + $0x220] sm:$0xff]
        %v818 = vld [vmem:[#allocation3 + $0x228] sm:$0xff]
        %v819 = vld [vmem:[#allocation3 + $0x230] sm:$0xff]
        %v820 = vld [vmem:[#allocation3 + $0x238] sm:$0xff]
        %v821 = vld [vmem:[#allocation3 + $0x240] sm:$0xff]
        %v822 = vld [vmem:[#allocation3 + $0x248] sm:$0xff]
        %v823 = vld [vmem:[#allocation3 + $0x250] sm:$0xff]
        %v824 = vld [vmem:[#allocation3 + $0x258] sm:$0xff]
        %v825 = vld [vmem:[#allocation3 + $0x260] sm:$0xff]
        %v826 = vld [vmem:[#allocation3 + $0x268] sm:$0xff]
        %v827 = vld [vmem:[#allocation3 + $0x270] sm:$0xff]
        %v828 = vld [vmem:[#allocation3 + $0x278] sm:$0xff]
        %v829 = vld [vmem:[#allocation3 + $0x280] sm:$0xff]
        %v830 = vld [vmem:[#allocation3 + $0x288] sm:$0xff]
        %v831 = vld [vmem:[#allocation3 + $0x290] sm:$0xff]
        %v832 = vld [vmem:[#allocation3 + $0x298] sm:$0xff]
        %v833 = vld [vmem:[#allocation3 + $0x2a0] sm:$0xff]
        %v834 = vld [vmem:[#allocation3 + $0x2a8] sm:$0xff]
        %v835 = vld [vmem:[#allocation3 + $0x2b0] sm:$0xff]
        %v836 = vld [vmem:[#allocation3 + $0x2b8] sm:$0xff]
        %v837 = vld [vmem:[#allocation3 + $0x2c0] sm:$0xff]
        %v838 = vld [vmem:[#allocation3 + $0x2c8] sm:$0xff]
        %v839 = vld [vmem:[#allocation3 + $0x2d0] sm:$0xff]
        %v840 = vld [vmem:[#allocation3 + $0x2d8] sm:$0xff]
        %v841 = vld [vmem:[#allocation3 + $0x2e0] sm:$0xff]
        %v842 = vld [vmem:[#allocation3 + $0x2e8] sm:$0xff]
        %v843 = vld [vmem:[#allocation3 + $0x2f0] sm:$0xff]
        %v844 = vld [vmem:[#allocation3 + $0x2f8] sm:$0xff]
        %v845 = vld [vmem:[%s6] sm:$0x1]
        %v846 = vld [vmem:[%s6 + $0x1] sm:$0x1]
        %v847 = vld [vmem:[%s388] sm:$0xff]
        %s848 = smul.u32 %s32, 4
        %v849 = vld [vmem:[#allocation5] sm:$0xff]
        %v850 = vld [vmem:[#allocation5 + $0x8] sm:$0xff]
        %s851 = smul.u32 0, 3
        %s852 = smul.addr %s851, 8
        %s853 = scalar_lea.vmem [#allocation4], %s852
        %v854 = vld [vmem:[%s853] sm:$0xff]
        %v855 = vld [vmem:[%s853 + $0x8] sm:$0xff]
        %v856 = vld [vmem:[%s853 + $0x10] sm:$0xff]
        %v857 = vld [vmem:[%s853 + $0x60] sm:$0xff]
        %v858 = vld [vmem:[%s853 + $0x68] sm:$0xff]
        %v859 = vld [vmem:[%s853 + $0x70] sm:$0xff]
        %860 = vmatpush.msra.mxu0 %v794
        %861 = vmatpush.msra.mxu0 %v791
        %862 = vmatpush.msra.mxu0 %v788
        %863 = vmatpush.msra.mxu0 %v785
        %864 = vmatpush.msra.mxu0 %v782
        %865 = vmatpush.msra.mxu0 %v779
        %866 = vmatpush.msra.mxu0 %v776
        %867 = vmatpush.msra.mxu0 %v773
        %868 = vmatpush.msra.mxu0 %v770
        %869 = vmatpush.msra.mxu0 %v767
        %870 = vmatpush.msra.mxu0 %v764
        %871 = vmatpush.msra.mxu0 %v761
        %872 = vmatpush.msra.mxu0 %v758
        %873 = vmatpush.msra.mxu0 %v755
        %874 = vmatpush.msra.mxu0 %v752
        %875 = vmatpush.msra.mxu0 %v749
        %876 = vmatmul.f32.gmra.mxu0 %v849
        %v877 = vpop.f32.mrf.mxu0
        %v878 = vadd.f32 0.0, %v877
        %879 = vdwg.mxu0
        %880 = vmatpush.msra.mxu0 %v795
        %881 = vmatpush.msra.mxu0 %v792
        %882 = vmatpush.msra.mxu0 %v789
        %883 = vmatpush.msra.mxu0 %v786
        %884 = vmatpush.msra.mxu0 %v783
        %885 = vmatpush.msra.mxu0 %v780
        %886 = vmatpush.msra.mxu0 %v777
        %887 = vmatpush.msra.mxu0 %v774
        %888 = vmatpush.msra.mxu0 %v771
        %889 = vmatpush.msra.mxu0 %v768
        %890 = vmatpush.msra.mxu0 %v765
        %891 = vmatpush.msra.mxu0 %v762
        %892 = vmatpush.msra.mxu0 %v759
        %893 = vmatpush.msra.mxu0 %v756
        %894 = vmatpush.msra.mxu0 %v753
        %895 = vmatpush.msra.mxu0 %v750
        %896 = vmatmul.f32.gmra.mxu0 %v849
        %v897 = vpop.f32.mrf.mxu0
        %v898 = vadd.f32 0.0, %v897
        %899 = vdwg.mxu0
        %900 = vmatpush.msra.mxu0 %v796
        %901 = vmatpush.msra.mxu0 %v793
        %902 = vmatpush.msra.mxu0 %v790
        %903 = vmatpush.msra.mxu0 %v787
        %904 = vmatpush.msra.mxu0 %v784
        %905 = vmatpush.msra.mxu0 %v781
        %906 = vmatpush.msra.mxu0 %v778
        %907 = vmatpush.msra.mxu0 %v775
        %908 = vmatpush.msra.mxu0 %v772
        %909 = vmatpush.msra.mxu0 %v769
        %910 = vmatpush.msra.mxu0 %v766
        %911 = vmatpush.msra.mxu0 %v763
        %912 = vmatpush.msra.mxu0 %v760
        %913 = vmatpush.msra.mxu0 %v757
        %914 = vmatpush.msra.mxu0 %v754
        %915 = vmatpush.msra.mxu0 %v751
        %916 = vmatmul.f32.gmra.mxu0 %v849
        %v917 = vpop.f32.mrf.mxu0
        %v918 = vadd.f32 0.0, %v917
        %919 = vdwg.mxu0
        %920 = vmatpush.msra.mxu0 %v842
        %921 = vmatpush.msra.mxu0 %v839
        %922 = vmatpush.msra.mxu0 %v836
        %923 = vmatpush.msra.mxu0 %v833
        %924 = vmatpush.msra.mxu0 %v830
        %925 = vmatpush.msra.mxu0 %v827
        %926 = vmatpush.msra.mxu0 %v824
        %927 = vmatpush.msra.mxu0 %v821
        %928 = vmatpush.msra.mxu0 %v818
        %929 = vmatpush.msra.mxu0 %v815
        %930 = vmatpush.msra.mxu0 %v812
        %931 = vmatpush.msra.mxu0 %v809
        %932 = vmatpush.msra.mxu0 %v806
        %933 = vmatpush.msra.mxu0 %v803
        %934 = vmatpush.msra.mxu0 %v800
        %935 = vmatpush.msra.mxu0 %v797
        %936 = vmatmul.f32.gmra.mxu0 %v850
        %v937 = vpop.f32.mrf.mxu0
        %v938 = vadd.f32 0.0, %v937
        %939 = vdwg.mxu0
        %940 = vmatpush.msra.mxu0 %v843
        %941 = vmatpush.msra.mxu0 %v840
        %942 = vmatpush.msra.mxu0 %v837
        %943 = vmatpush.msra.mxu0 %v834
        %944 = vmatpush.msra.mxu0 %v831
        %945 = vmatpush.msra.mxu0 %v828
        %946 = vmatpush.msra.mxu0 %v825
        %947 = vmatpush.msra.mxu0 %v822
        %948 = vmatpush.msra.mxu0 %v819
        %949 = vmatpush.msra.mxu0 %v816
        %950 = vmatpush.msra.mxu0 %v813
        %951 = vmatpush.msra.mxu0 %v810
        %952 = vmatpush.msra.mxu0 %v807
        %953 = vmatpush.msra.mxu0 %v804
        %954 = vmatpush.msra.mxu0 %v801
        %955 = vmatpush.msra.mxu0 %v798
        %956 = vmatmul.f32.gmra.mxu0 %v850
        %v957 = vpop.f32.mrf.mxu0
        %v958 = vadd.f32 0.0, %v957
        %959 = vdwg.mxu0
        %960 = vmatpush.msra.mxu0 %v844
        %961 = vmatpush.msra.mxu0 %v841
        %962 = vmatpush.msra.mxu0 %v838
        %963 = vmatpush.msra.mxu0 %v835
        %964 = vmatpush.msra.mxu0 %v832
        %965 = vmatpush.msra.mxu0 %v829
        %966 = vmatpush.msra.mxu0 %v826
        %967 = vmatpush.msra.mxu0 %v823
        %968 = vmatpush.msra.mxu0 %v820
        %969 = vmatpush.msra.mxu0 %v817
        %970 = vmatpush.msra.mxu0 %v814
        %971 = vmatpush.msra.mxu0 %v811
        %972 = vmatpush.msra.mxu0 %v808
        %973 = vmatpush.msra.mxu0 %v805
        %974 = vmatpush.msra.mxu0 %v802
        %975 = vmatpush.msra.mxu0 %v799
        %976 = vmatmul.f32.gmra.mxu0 %v850
        %v977 = vpop.f32.mrf.mxu0
        %v978 = vadd.f32 0.0, %v977
        %979 = vdwg.mxu0
        %v980 = vadd.f32 %v854, %v878
        %v981 = vadd.f32 %v855, %v898
        %v982 = vadd.f32 %v857, %v938
        %v983 = vadd.f32 %v858, %v958
        %v984 = vxor.u32 %v980, 2147483648
        %v985 = vxor.u32 %v981, 2147483648
        %v986 = vxor.u32 %v982, 2147483648
        %v987 = vxor.u32 %v983, 2147483648
        %v988 = vmul.f32 %v984, 1.442695
        %v989 = vpow.pop %v988
        %v990 = vmul.f32 %v985, 1.442695
        %v991 = vpow.pop %v990
        %v992 = vmul.f32 %v986, 1.442695
        %v993 = vpow.pop %v992
        %v994 = vmul.f32 %v987, 1.442695
        %v995 = vpow.pop %v994
        %v996 = vadd.f32 %v989, 1.0
        %v997 = vadd.f32 %v991, 1.0
        %v998 = vadd.f32 %v993, 1.0
        %v999 = vadd.f32 %v995, 1.0
        %v1000 = vrcp.pop %v996
        %v1001 = vmul.f32 %v996, %v1000
        %v1002 = vsub.f32 1.0, %v1001
        %v1003 = vmul.f32 %v1000, %v1002
        %v1004 = vadd.f32 %v1000, %v1003
        %vm1005 = vweird.f32 %v996
        %vm1006 = vweird.f32 %v1000
        %vm1007 = vmor %vm1005, %vm1006
        %v1008 = vsel %vm1007, %v1000, %v1004
        %v1009 = vand.u32 2147483647, %v996
        %vm1010 = vcmp.eq.f32.partialorder %v1009, 8.507059e+37
        %v1011 = vand.u32 %v996, 2147483648
        %v1012 = vor.u32 1.1754944e-38, %v1011
        %v1013 = vsel %vm1010, %v1012, %v1008
        %v1014 = vmul.f32 1.0, %v1013
        %v1015 = vrcp.pop %v997
        %v1016 = vmul.f32 %v997, %v1015
        %v1017 = vsub.f32 1.0, %v1016
        %v1018 = vmul.f32 %v1015, %v1017
        %v1019 = vadd.f32 %v1015, %v1018
        %vm1020 = vweird.f32 %v997
        %vm1021 = vweird.f32 %v1015
        %vm1022 = vmor %vm1020, %vm1021
        %v1023 = vsel %vm1022, %v1015, %v1019
        %v1024 = vand.u32 2147483647, %v997
        %vm1025 = vcmp.eq.f32.partialorder %v1024, 8.507059e+37
        %v1026 = vand.u32 %v997, 2147483648
        %v1027 = vor.u32 1.1754944e-38, %v1026
        %v1028 = vsel %vm1025, %v1027, %v1023
        %v1029 = vmul.f32 1.0, %v1028
        %v1030 = vrcp.pop %v998
        %v1031 = vmul.f32 %v998, %v1030
        %v1032 = vsub.f32 1.0, %v1031
        %v1033 = vmul.f32 %v1030, %v1032
        %v1034 = vadd.f32 %v1030, %v1033
        %vm1035 = vweird.f32 %v998
        %vm1036 = vweird.f32 %v1030
        %vm1037 = vmor %vm1035, %vm1036
        %v1038 = vsel %vm1037, %v1030, %v1034
        %v1039 = vand.u32 2147483647, %v998
        %vm1040 = vcmp.eq.f32.partialorder %v1039, 8.507059e+37
        %v1041 = vand.u32 %v998, 2147483648
        %v1042 = vor.u32 1.1754944e-38, %v1041
        %v1043 = vsel %vm1040, %v1042, %v1038
        %v1044 = vmul.f32 1.0, %v1043
        %v1045 = vrcp.pop %v999
        %v1046 = vmul.f32 %v999, %v1045
        %v1047 = vsub.f32 1.0, %v1046
        %v1048 = vmul.f32 %v1045, %v1047
        %v1049 = vadd.f32 %v1045, %v1048
        %vm1050 = vweird.f32 %v999
        %vm1051 = vweird.f32 %v1045
        %vm1052 = vmor %vm1050, %vm1051
        %v1053 = vsel %vm1052, %v1045, %v1049
        %v1054 = vand.u32 2147483647, %v999
        %vm1055 = vcmp.eq.f32.partialorder %v1054, 8.507059e+37
        %v1056 = vand.u32 %v999, 2147483648
        %v1057 = vor.u32 1.1754944e-38, %v1056
        %v1058 = vsel %vm1055, %v1057, %v1053
        %v1059 = vmul.f32 1.0, %v1058
        %v1062 = vperm.slane %v845, 0
        %v1063 = vperm.slane %v846, 0
        %v1066 = vadd.f32 %v918, %v1062
        %v1067 = vadd.f32 %v978, %v1063
        %v1068 = vmul.f32 %v1014, %v1066
        %v1069 = vmul.f32 %v1044, %v1067
        %v1070 = vadd.f32 %v856, %v1068
        %v1071 = vadd.f32 %v859, %v1069
        %v1072 = vtanh.pop %v1070
        %v1073 = vtanh.pop %v1071
        %v1074 = vsub.f32 1.0, %v1029
        %v1075 = vsub.f32 1.0, %v1059
        %v1076 = vmul.f32 %v1074, %v1072
        %v1077 = vmul.f32 %v1075, %v1073
        %v1078 = vmul.f32 %v1029, %v849
        %v1079 = vmul.f32 %v1059, %v850
        %v1080 = vadd.f32 %v1076, %v1078
        %v1081 = vadd.f32 %v1077, %v1079
        %v1082 = vstv %s848
        %vm1083 = vcmp.lt.s32.totalorder %v1082, %v847
        %s1084 = ssub.s32 7, %s848
        %v1085 = vstv %s1084
        %vm1086 = vcmp.lt.s32.totalorder %v1085, %v847
        %v1087 = vsel %vm1083, 1, 0
        %v1088 = vsel %vm1086, 1, 0
        %1089 = vset.pattern.permute.xlu0 0
        %1090 = vperm.xlu0 %1089, %v1087
        %v1091 = vpop.permute.xlu0 %1090
        %1092 = vset.pattern.permute.xlu0 0
        %1093 = vperm.xlu0 %1092, %v1088
        %v1094 = vpop.permute.xlu0 %1093
        %vm1095 = vcmp.eq.s32.totalorder %v1091, 1
        %vm1096 = vcmp.eq.s32.totalorder %v1094, 1
        %v1097 = vsel %vm1095, %v1080, %v849
        %v1098 = vsel %vm1096, %v1081, %v850
        %s1099 = smul.u32 1, 3
        %s1100 = smul.addr %s1099, 8
        %s1101 = scalar_lea.vmem [#allocation4], %s1100
        %v1102 = vld [vmem:[%s1101] sm:$0xff]
        %v1103 = vld [vmem:[%s1101 + $0x8] sm:$0xff]
        %v1104 = vld [vmem:[%s1101 + $0x10] sm:$0xff]
        %v1105 = vld [vmem:[%s1101 + $0x60] sm:$0xff]
        %v1106 = vld [vmem:[%s1101 + $0x68] sm:$0xff]
        %v1107 = vld [vmem:[%s1101 + $0x70] sm:$0xff]
        %1108 = vmatpush.msra.mxu0 %v794
        %1109 = vmatpush.msra.mxu0 %v791
        %1110 = vmatpush.msra.mxu0 %v788
        %1111 = vmatpush.msra.mxu0 %v785
        %1112 = vmatpush.msra.mxu0 %v782
        %1113 = vmatpush.msra.mxu0 %v779
        %1114 = vmatpush.msra.mxu0 %v776
        %1115 = vmatpush.msra.mxu0 %v773
        %1116 = vmatpush.msra.mxu0 %v770
        %1117 = vmatpush.msra.mxu0 %v767
        %1118 = vmatpush.msra.mxu0 %v764
        %1119 = vmatpush.msra.mxu0 %v761
        %1120 = vmatpush.msra.mxu0 %v758
        %1121 = vmatpush.msra.mxu0 %v755
        %1122 = vmatpush.msra.mxu0 %v752
        %1123 = vmatpush.msra.mxu0 %v749
        %1124 = vmatmul.f32.gmra.mxu0 %v1097
        %v1125 = vpop.f32.mrf.mxu0
        %v1126 = vadd.f32 0.0, %v1125
        %1127 = vdwg.mxu0
        %1128 = vmatpush.msra.mxu0 %v795
        %1129 = vmatpush.msra.mxu0 %v792
        %1130 = vmatpush.msra.mxu0 %v789
        %1131 = vmatpush.msra.mxu0 %v786
        %1132 = vmatpush.msra.mxu0 %v783
        %1133 = vmatpush.msra.mxu0 %v780
        %1134 = vmatpush.msra.mxu0 %v777
        %1135 = vmatpush.msra.mxu0 %v774
        %1136 = vmatpush.msra.mxu0 %v771
        %1137 = vmatpush.msra.mxu0 %v768
        %1138 = vmatpush.msra.mxu0 %v765
        %1139 = vmatpush.msra.mxu0 %v762
        %1140 = vmatpush.msra.mxu0 %v759
        %1141 = vmatpush.msra.mxu0 %v756
        %1142 = vmatpush.msra.mxu0 %v753
        %1143 = vmatpush.msra.mxu0 %v750
        %1144 = vmatmul.f32.gmra.mxu0 %v1097
        %v1145 = vpop.f32.mrf.mxu0
        %v1146 = vadd.f32 0.0, %v1145
        %1147 = vdwg.mxu0
        %1148 = vmatpush.msra.mxu0 %v796
        %1149 = vmatpush.msra.mxu0 %v793
        %1150 = vmatpush.msra.mxu0 %v790
        %1151 = vmatpush.msra.mxu0 %v787
        %1152 = vmatpush.msra.mxu0 %v784
        %1153 = vmatpush.msra.mxu0 %v781
        %1154 = vmatpush.msra.mxu0 %v778
        %1155 = vmatpush.msra.mxu0 %v775
        %1156 = vmatpush.msra.mxu0 %v772
        %1157 = vmatpush.msra.mxu0 %v769
        %1158 = vmatpush.msra.mxu0 %v766
        %1159 = vmatpush.msra.mxu0 %v763
        %1160 = vmatpush.msra.mxu0 %v760
        %1161 = vmatpush.msra.mxu0 %v757
        %1162 = vmatpush.msra.mxu0 %v754
        %1163 = vmatpush.msra.mxu0 %v751
        %1164 = vmatmul.f32.gmra.mxu0 %v1097
        %v1165 = vpop.f32.mrf.mxu0
        %v1166 = vadd.f32 0.0, %v1165
        %1167 = vdwg.mxu0
        %1168 = vmatpush.msra.mxu0 %v842
        %1169 = vmatpush.msra.mxu0 %v839
        %1170 = vmatpush.msra.mxu0 %v836
        %1171 = vmatpush.msra.mxu0 %v833
        %1172 = vmatpush.msra.mxu0 %v830
        %1173 = vmatpush.msra.mxu0 %v827
        %1174 = vmatpush.msra.mxu0 %v824
        %1175 = vmatpush.msra.mxu0 %v821
        %1176 = vmatpush.msra.mxu0 %v818
        %1177 = vmatpush.msra.mxu0 %v815
        %1178 = vmatpush.msra.mxu0 %v812
        %1179 = vmatpush.msra.mxu0 %v809
        %1180 = vmatpush.msra.mxu0 %v806
        %1181 = vmatpush.msra.mxu0 %v803
        %1182 = vmatpush.msra.mxu0 %v800
        %1183 = vmatpush.msra.mxu0 %v797
        %1184 = vmatmul.f32.gmra.mxu0 %v1098
        %v1185 = vpop.f32.mrf.mxu0
        %v1186 = vadd.f32 0.0, %v1185
        %1187 = vdwg.mxu0
        %1188 = vmatpush.msra.mxu0 %v843
        %1189 = vmatpush.msra.mxu0 %v840
        %1190 = vmatpush.msra.mxu0 %v837
        %1191 = vmatpush.msra.mxu0 %v834
        %1192 = vmatpush.msra.mxu0 %v831
        %1193 = vmatpush.msra.mxu0 %v828
        %1194 = vmatpush.msra.mxu0 %v825
        %1195 = vmatpush.msra.mxu0 %v822
        %1196 = vmatpush.msra.mxu0 %v819
        %1197 = vmatpush.msra.mxu0 %v816
        %1198 = vmatpush.msra.mxu0 %v813
        %1199 = vmatpush.msra.mxu0 %v810
        %1200 = vmatpush.msra.mxu0 %v807
        %1201 = vmatpush.msra.mxu0 %v804
        %1202 = vmatpush.msra.mxu0 %v801
        %1203 = vmatpush.msra.mxu0 %v798
        %1204 = vmatmul.f32.gmra.mxu0 %v1098
        %v1205 = vpop.f32.mrf.mxu0
        %v1206 = vadd.f32 0.0, %v1205
        %1207 = vdwg.mxu0
        %1208 = vmatpush.msra.mxu0 %v844
        %1209 = vmatpush.msra.mxu0 %v841
        %1210 = vmatpush.msra.mxu0 %v838
        %1211 = vmatpush.msra.mxu0 %v835
        %1212 = vmatpush.msra.mxu0 %v832
        %1213 = vmatpush.msra.mxu0 %v829
        %1214 = vmatpush.msra.mxu0 %v826
        %1215 = vmatpush.msra.mxu0 %v823
        %1216 = vmatpush.msra.mxu0 %v820
        %1217 = vmatpush.msra.mxu0 %v817
        %1218 = vmatpush.msra.mxu0 %v814
        %1219 = vmatpush.msra.mxu0 %v811
        %1220 = vmatpush.msra.mxu0 %v808
        %1221 = vmatpush.msra.mxu0 %v805
        %1222 = vmatpush.msra.mxu0 %v802
        %1223 = vmatpush.msra.mxu0 %v799
        %1224 = vmatmul.f32.gmra.mxu0 %v1098
        %v1225 = vpop.f32.mrf.mxu0
        %v1226 = vadd.f32 0.0, %v1225
        %1227 = vdwg.mxu0
        %v1228 = vadd.f32 %v1102, %v1126
        %v1229 = vadd.f32 %v1103, %v1146
        %v1230 = vadd.f32 %v1105, %v1186
        %v1231 = vadd.f32 %v1106, %v1206
        %v1232 = vxor.u32 %v1228, 2147483648
        %v1233 = vxor.u32 %v1229, 2147483648
        %v1234 = vxor.u32 %v1230, 2147483648
        %v1235 = vxor.u32 %v1231, 2147483648
        %v1236 = vmul.f32 %v1232, 1.442695
        %v1237 = vpow.pop %v1236
        %v1238 = vmul.f32 %v1233, 1.442695
        %v1239 = vpow.pop %v1238
        %v1240 = vmul.f32 %v1234, 1.442695
        %v1241 = vpow.pop %v1240
        %v1242 = vmul.f32 %v1235, 1.442695
        %v1243 = vpow.pop %v1242
        %v1244 = vadd.f32 %v1237, 1.0
        %v1245 = vadd.f32 %v1239, 1.0
        %v1246 = vadd.f32 %v1241, 1.0
        %v1247 = vadd.f32 %v1243, 1.0
        %v1248 = vrcp.pop %v1244
        %v1249 = vmul.f32 %v1244, %v1248
        %v1250 = vsub.f32 1.0, %v1249
        %v1251 = vmul.f32 %v1248, %v1250
        %v1252 = vadd.f32 %v1248, %v1251
        %vm1253 = vweird.f32 %v1244
        %vm1254 = vweird.f32 %v1248
        %vm1255 = vmor %vm1253, %vm1254
        %v1256 = vsel %vm1255, %v1248, %v1252
        %v1257 = vand.u32 2147483647, %v1244
        %vm1258 = vcmp.eq.f32.partialorder %v1257, 8.507059e+37
        %v1259 = vand.u32 %v1244, 2147483648
        %v1260 = vor.u32 1.1754944e-38, %v1259
        %v1261 = vsel %vm1258, %v1260, %v1256
        %v1262 = vmul.f32 1.0, %v1261
        %v1263 = vrcp.pop %v1245
        %v1264 = vmul.f32 %v1245, %v1263
        %v1265 = vsub.f32 1.0, %v1264
        %v1266 = vmul.f32 %v1263, %v1265
        %v1267 = vadd.f32 %v1263, %v1266
        %vm1268 = vweird.f32 %v1245
        %vm1269 = vweird.f32 %v1263
        %vm1270 = vmor %vm1268, %vm1269
        %v1271 = vsel %vm1270, %v1263, %v1267
        %v1272 = vand.u32 2147483647, %v1245
        %vm1273 = vcmp.eq.f32.partialorder %v1272, 8.507059e+37
        %v1274 = vand.u32 %v1245, 2147483648
        %v1275 = vor.u32 1.1754944e-38, %v1274
        %v1276 = vsel %vm1273, %v1275, %v1271
        %v1277 = vmul.f32 1.0, %v1276
        %v1278 = vrcp.pop %v1246
        %v1279 = vmul.f32 %v1246, %v1278
        %v1280 = vsub.f32 1.0, %v1279
        %v1281 = vmul.f32 %v1278, %v1280
        %v1282 = vadd.f32 %v1278, %v1281
        %vm1283 = vweird.f32 %v1246
        %vm1284 = vweird.f32 %v1278
        %vm1285 = vmor %vm1283, %vm1284
        %v1286 = vsel %vm1285, %v1278, %v1282
        %v1287 = vand.u32 2147483647, %v1246
        %vm1288 = vcmp.eq.f32.partialorder %v1287, 8.507059e+37
        %v1289 = vand.u32 %v1246, 2147483648
        %v1290 = vor.u32 1.1754944e-38, %v1289
        %v1291 = vsel %vm1288, %v1290, %v1286
        %v1292 = vmul.f32 1.0, %v1291
        %v1293 = vrcp.pop %v1247
        %v1294 = vmul.f32 %v1247, %v1293
        %v1295 = vsub.f32 1.0, %v1294
        %v1296 = vmul.f32 %v1293, %v1295
        %v1297 = vadd.f32 %v1293, %v1296
        %vm1298 = vweird.f32 %v1247
        %vm1299 = vweird.f32 %v1293
        %vm1300 = vmor %vm1298, %vm1299
        %v1301 = vsel %vm1300, %v1293, %v1297
        %v1302 = vand.u32 2147483647, %v1247
        %vm1303 = vcmp.eq.f32.partialorder %v1302, 8.507059e+37
        %v1304 = vand.u32 %v1247, 2147483648
        %v1305 = vor.u32 1.1754944e-38, %v1304
        %v1306 = vsel %vm1303, %v1305, %v1301
        %v1307 = vmul.f32 1.0, %v1306
        %v1308 = vadd.f32 %v1166, %v1062
        %v1309 = vadd.f32 %v1226, %v1063
        %v1310 = vmul.f32 %v1262, %v1308
        %v1311 = vmul.f32 %v1292, %v1309
        %v1312 = vadd.f32 %v1104, %v1310
        %v1313 = vadd.f32 %v1107, %v1311
        %v1314 = vtanh.pop %v1312
        %v1315 = vtanh.pop %v1313
        %v1316 = vsub.f32 1.0, %v1277
        %v1317 = vsub.f32 1.0, %v1307
        %v1318 = vmul.f32 %v1316, %v1314
        %v1319 = vmul.f32 %v1317, %v1315
        %v1320 = vmul.f32 %v1277, %v1097
        %v1321 = vmul.f32 %v1307, %v1098
        %v1322 = vadd.f32 %v1318, %v1320
        %v1323 = vadd.f32 %v1319, %v1321
        %s1324 = sadd.s32 %s848, 1
        %v1325 = vstv %s1324
        %vm1326 = vcmp.lt.s32.totalorder %v1325, %v847
        %s1327 = ssub.s32 6, %s848
        %v1328 = vstv %s1327
        %vm1329 = vcmp.lt.s32.totalorder %v1328, %v847
        %v1330 = vsel %vm1326, 1, 0
        %v1331 = vsel %vm1329, 1, 0
        %1332 = vset.pattern.permute.xlu0 0
        %1333 = vperm.xlu0 %1332, %v1330
        %v1334 = vpop.permute.xlu0 %1333
        %1335 = vset.pattern.permute.xlu0 0
        %1336 = vperm.xlu0 %1335, %v1331
        %v1337 = vpop.permute.xlu0 %1336
        %vm1338 = vcmp.eq.s32.totalorder %v1334, 1
        %vm1339 = vcmp.eq.s32.totalorder %v1337, 1
        %v1340 = vsel %vm1338, %v1322, %v1097
        %v1341 = vsel %vm1339, %v1323, %v1098
        %s1342 = smul.u32 2, 3
        %s1343 = smul.addr %s1342, 8
        %s1344 = scalar_lea.vmem [#allocation4], %s1343
        %v1345 = vld [vmem:[%s1344] sm:$0xff]
        %v1346 = vld [vmem:[%s1344 + $0x8] sm:$0xff]
        %v1347 = vld [vmem:[%s1344 + $0x10] sm:$0xff]
        %v1348 = vld [vmem:[%s1344 + $0x60] sm:$0xff]
        %v1349 = vld [vmem:[%s1344 + $0x68] sm:$0xff]
        %v1350 = vld [vmem:[%s1344 + $0x70] sm:$0xff]
        %1351 = vmatpush.msra.mxu0 %v794
        %1352 = vmatpush.msra.mxu0 %v791
        %1353 = vmatpush.msra.mxu0 %v788
        %1354 = vmatpush.msra.mxu0 %v785
        %1355 = vmatpush.msra.mxu0 %v782
        %1356 = vmatpush.msra.mxu0 %v779
        %1357 = vmatpush.msra.mxu0 %v776
        %1358 = vmatpush.msra.mxu0 %v773
        %1359 = vmatpush.msra.mxu0 %v770
        %1360 = vmatpush.msra.mxu0 %v767
        %1361 = vmatpush.msra.mxu0 %v764
        %1362 = vmatpush.msra.mxu0 %v761
        %1363 = vmatpush.msra.mxu0 %v758
        %1364 = vmatpush.msra.mxu0 %v755
        %1365 = vmatpush.msra.mxu0 %v752
        %1366 = vmatpush.msra.mxu0 %v749
        %1367 = vmatmul.f32.gmra.mxu0 %v1340
        %v1368 = vpop.f32.mrf.mxu0
        %v1369 = vadd.f32 0.0, %v1368
        %1370 = vdwg.mxu0
        %1371 = vmatpush.msra.mxu0 %v795
        %1372 = vmatpush.msra.mxu0 %v792
        %1373 = vmatpush.msra.mxu0 %v789
        %1374 = vmatpush.msra.mxu0 %v786
        %1375 = vmatpush.msra.mxu0 %v783
        %1376 = vmatpush.msra.mxu0 %v780
        %1377 = vmatpush.msra.mxu0 %v777
        %1378 = vmatpush.msra.mxu0 %v774
        %1379 = vmatpush.msra.mxu0 %v771
        %1380 = vmatpush.msra.mxu0 %v768
        %1381 = vmatpush.msra.mxu0 %v765
        %1382 = vmatpush.msra.mxu0 %v762
        %1383 = vmatpush.msra.mxu0 %v759
        %1384 = vmatpush.msra.mxu0 %v756
        %1385 = vmatpush.msra.mxu0 %v753
        %1386 = vmatpush.msra.mxu0 %v750
        %1387 = vmatmul.f32.gmra.mxu0 %v1340
        %v1388 = vpop.f32.mrf.mxu0
        %v1389 = vadd.f32 0.0, %v1388
        %1390 = vdwg.mxu0
        %1391 = vmatpush.msra.mxu0 %v796
        %1392 = vmatpush.msra.mxu0 %v793
        %1393 = vmatpush.msra.mxu0 %v790
        %1394 = vmatpush.msra.mxu0 %v787
        %1395 = vmatpush.msra.mxu0 %v784
        %1396 = vmatpush.msra.mxu0 %v781
        %1397 = vmatpush.msra.mxu0 %v778
        %1398 = vmatpush.msra.mxu0 %v775
        %1399 = vmatpush.msra.mxu0 %v772
        %1400 = vmatpush.msra.mxu0 %v769
        %1401 = vmatpush.msra.mxu0 %v766
        %1402 = vmatpush.msra.mxu0 %v763
        %1403 = vmatpush.msra.mxu0 %v760
        %1404 = vmatpush.msra.mxu0 %v757
        %1405 = vmatpush.msra.mxu0 %v754
        %1406 = vmatpush.msra.mxu0 %v751
        %1407 = vmatmul.f32.gmra.mxu0 %v1340
        %v1408 = vpop.f32.mrf.mxu0
        %v1409 = vadd.f32 0.0, %v1408
        %1410 = vdwg.mxu0
        %1411 = vmatpush.msra.mxu0 %v842
        %1412 = vmatpush.msra.mxu0 %v839
        %1413 = vmatpush.msra.mxu0 %v836
        %1414 = vmatpush.msra.mxu0 %v833
        %1415 = vmatpush.msra.mxu0 %v830
        %1416 = vmatpush.msra.mxu0 %v827
        %1417 = vmatpush.msra.mxu0 %v824
        %1418 = vmatpush.msra.mxu0 %v821
        %1419 = vmatpush.msra.mxu0 %v818
        %1420 = vmatpush.msra.mxu0 %v815
        %1421 = vmatpush.msra.mxu0 %v812
        %1422 = vmatpush.msra.mxu0 %v809
        %1423 = vmatpush.msra.mxu0 %v806
        %1424 = vmatpush.msra.mxu0 %v803
        %1425 = vmatpush.msra.mxu0 %v800
        %1426 = vmatpush.msra.mxu0 %v797
        %1427 = vmatmul.f32.gmra.mxu0 %v1341
        %v1428 = vpop.f32.mrf.mxu0
        %v1429 = vadd.f32 0.0, %v1428
        %1430 = vdwg.mxu0
        %1431 = vmatpush.msra.mxu0 %v843
        %1432 = vmatpush.msra.mxu0 %v840
        %1433 = vmatpush.msra.mxu0 %v837
        %1434 = vmatpush.msra.mxu0 %v834
        %1435 = vmatpush.msra.mxu0 %v831
        %1436 = vmatpush.msra.mxu0 %v828
        %1437 = vmatpush.msra.mxu0 %v825
        %1438 = vmatpush.msra.mxu0 %v822
        %1439 = vmatpush.msra.mxu0 %v819
        %1440 = vmatpush.msra.mxu0 %v816
        %1441 = vmatpush.msra.mxu0 %v813
        %1442 = vmatpush.msra.mxu0 %v810
        %1443 = vmatpush.msra.mxu0 %v807
        %1444 = vmatpush.msra.mxu0 %v804
        %1445 = vmatpush.msra.mxu0 %v801
        %1446 = vmatpush.msra.mxu0 %v798
        %1447 = vmatmul.f32.gmra.mxu0 %v1341
        %v1448 = vpop.f32.mrf.mxu0
        %v1449 = vadd.f32 0.0, %v1448
        %1450 = vdwg.mxu0
        %1451 = vmatpush.msra.mxu0 %v844
        %1452 = vmatpush.msra.mxu0 %v841
        %1453 = vmatpush.msra.mxu0 %v838
        %1454 = vmatpush.msra.mxu0 %v835
        %1455 = vmatpush.msra.mxu0 %v832
        %1456 = vmatpush.msra.mxu0 %v829
        %1457 = vmatpush.msra.mxu0 %v826
        %1458 = vmatpush.msra.mxu0 %v823
        %1459 = vmatpush.msra.mxu0 %v820
        %1460 = vmatpush.msra.mxu0 %v817
        %1461 = vmatpush.msra.mxu0 %v814
        %1462 = vmatpush.msra.mxu0 %v811
        %1463 = vmatpush.msra.mxu0 %v808
        %1464 = vmatpush.msra.mxu0 %v805
        %1465 = vmatpush.msra.mxu0 %v802
        %1466 = vmatpush.msra.mxu0 %v799
        %1467 = vmatmul.f32.gmra.mxu0 %v1341
        %v1468 = vpop.f32.mrf.mxu0
        %v1469 = vadd.f32 0.0, %v1468
        %1470 = vdwg.mxu0
        %v1471 = vadd.f32 %v1345, %v1369
        %v1472 = vadd.f32 %v1346, %v1389
        %v1473 = vadd.f32 %v1348, %v1429
        %v1474 = vadd.f32 %v1349, %v1449
        %v1475 = vxor.u32 %v1471, 2147483648
        %v1476 = vxor.u32 %v1472, 2147483648
        %v1477 = vxor.u32 %v1473, 2147483648
        %v1478 = vxor.u32 %v1474, 2147483648
        %v1479 = vmul.f32 %v1475, 1.442695
        %v1480 = vpow.pop %v1479
        %v1481 = vmul.f32 %v1476, 1.442695
        %v1482 = vpow.pop %v1481
        %v1483 = vmul.f32 %v1477, 1.442695
        %v1484 = vpow.pop %v1483
        %v1485 = vmul.f32 %v1478, 1.442695
        %v1486 = vpow.pop %v1485
        %v1487 = vadd.f32 %v1480, 1.0
        %v1488 = vadd.f32 %v1482, 1.0
        %v1489 = vadd.f32 %v1484, 1.0
        %v1490 = vadd.f32 %v1486, 1.0
        %v1491 = vrcp.pop %v1487
        %v1492 = vmul.f32 %v1487, %v1491
        %v1493 = vsub.f32 1.0, %v1492
        %v1494 = vmul.f32 %v1491, %v1493
        %v1495 = vadd.f32 %v1491, %v1494
        %vm1496 = vweird.f32 %v1487
        %vm1497 = vweird.f32 %v1491
        %vm1498 = vmor %vm1496, %vm1497
        %v1499 = vsel %vm1498, %v1491, %v1495
        %v1500 = vand.u32 2147483647, %v1487
        %vm1501 = vcmp.eq.f32.partialorder %v1500, 8.507059e+37
        %v1502 = vand.u32 %v1487, 2147483648
        %v1503 = vor.u32 1.1754944e-38, %v1502
        %v1504 = vsel %vm1501, %v1503, %v1499
        %v1505 = vmul.f32 1.0, %v1504
        %v1506 = vrcp.pop %v1488
        %v1507 = vmul.f32 %v1488, %v1506
        %v1508 = vsub.f32 1.0, %v1507
        %v1509 = vmul.f32 %v1506, %v1508
        %v1510 = vadd.f32 %v1506, %v1509
        %vm1511 = vweird.f32 %v1488
        %vm1512 = vweird.f32 %v1506
        %vm1513 = vmor %vm1511, %vm1512
        %v1514 = vsel %vm1513, %v1506, %v1510
        %v1515 = vand.u32 2147483647, %v1488
        %vm1516 = vcmp.eq.f32.partialorder %v1515, 8.507059e+37
        %v1517 = vand.u32 %v1488, 2147483648
        %v1518 = vor.u32 1.1754944e-38, %v1517
        %v1519 = vsel %vm1516, %v1518, %v1514
        %v1520 = vmul.f32 1.0, %v1519
        %v1521 = vrcp.pop %v1489
        %v1522 = vmul.f32 %v1489, %v1521
        %v1523 = vsub.f32 1.0, %v1522
        %v1524 = vmul.f32 %v1521, %v1523
        %v1525 = vadd.f32 %v1521, %v1524
        %vm1526 = vweird.f32 %v1489
        %vm1527 = vweird.f32 %v1521
        %vm1528 = vmor %vm1526, %vm1527
        %v1529 = vsel %vm1528, %v1521, %v1525
        %v1530 = vand.u32 2147483647, %v1489
        %vm1531 = vcmp.eq.f32.partialorder %v1530, 8.507059e+37
        %v1532 = vand.u32 %v1489, 2147483648
        %v1533 = vor.u32 1.1754944e-38, %v1532
        %v1534 = vsel %vm1531, %v1533, %v1529
        %v1535 = vmul.f32 1.0, %v1534
        %v1536 = vrcp.pop %v1490
        %v1537 = vmul.f32 %v1490, %v1536
        %v1538 = vsub.f32 1.0, %v1537
        %v1539 = vmul.f32 %v1536, %v1538
        %v1540 = vadd.f32 %v1536, %v1539
        %vm1541 = vweird.f32 %v1490
        %vm1542 = vweird.f32 %v1536
        %vm1543 = vmor %vm1541, %vm1542
        %v1544 = vsel %vm1543, %v1536, %v1540
        %v1545 = vand.u32 2147483647, %v1490
        %vm1546 = vcmp.eq.f32.partialorder %v1545, 8.507059e+37
        %v1547 = vand.u32 %v1490, 2147483648
        %v1548 = vor.u32 1.1754944e-38, %v1547
        %v1549 = vsel %vm1546, %v1548, %v1544
        %v1550 = vmul.f32 1.0, %v1549
        %v1551 = vadd.f32 %v1409, %v1062
        %v1552 = vadd.f32 %v1469, %v1063
        %v1553 = vmul.f32 %v1505, %v1551
        %v1554 = vmul.f32 %v1535, %v1552
        %v1555 = vadd.f32 %v1347, %v1553
        %v1556 = vadd.f32 %v1350, %v1554
        %v1557 = vtanh.pop %v1555
        %v1558 = vtanh.pop %v1556
        %v1559 = vsub.f32 1.0, %v1520
        %v1560 = vsub.f32 1.0, %v1550
        %v1561 = vmul.f32 %v1559, %v1557
        %v1562 = vmul.f32 %v1560, %v1558
        %v1563 = vmul.f32 %v1520, %v1340
        %v1564 = vmul.f32 %v1550, %v1341
        %v1565 = vadd.f32 %v1561, %v1563
        %v1566 = vadd.f32 %v1562, %v1564
        %s1567 = sadd.s32 %s848, 2
        %v1568 = vstv %s1567
        %vm1569 = vcmp.lt.s32.totalorder %v1568, %v847
        %s1570 = ssub.s32 5, %s848
        %v1571 = vstv %s1570
        %vm1572 = vcmp.lt.s32.totalorder %v1571, %v847
        %v1573 = vsel %vm1569, 1, 0
        %v1574 = vsel %vm1572, 1, 0
        %1575 = vset.pattern.permute.xlu0 0
        %1576 = vperm.xlu0 %1575, %v1573
        %v1577 = vpop.permute.xlu0 %1576
        %1578 = vset.pattern.permute.xlu0 0
        %1579 = vperm.xlu0 %1578, %v1574
        %v1580 = vpop.permute.xlu0 %1579
        %vm1581 = vcmp.eq.s32.totalorder %v1577, 1
        %vm1582 = vcmp.eq.s32.totalorder %v1580, 1
        %v1583 = vsel %vm1581, %v1565, %v1340
        %v1584 = vsel %vm1582, %v1566, %v1341
        %s1585 = smul.u32 3, 3
        %s1586 = smul.addr %s1585, 8
        %s1587 = scalar_lea.vmem [#allocation4], %s1586
        %v1588 = vld [vmem:[%s1587] sm:$0xff]
        %v1589 = vld [vmem:[%s1587 + $0x8] sm:$0xff]
        %v1590 = vld [vmem:[%s1587 + $0x10] sm:$0xff]
        %v1591 = vld [vmem:[%s1587 + $0x60] sm:$0xff]
        %v1592 = vld [vmem:[%s1587 + $0x68] sm:$0xff]
        %v1593 = vld [vmem:[%s1587 + $0x70] sm:$0xff]
        %1594 = vmatpush.msra.mxu0 %v794
        %1595 = vmatpush.msra.mxu0 %v791
        %1596 = vmatpush.msra.mxu0 %v788
        %1597 = vmatpush.msra.mxu0 %v785
        %1598 = vmatpush.msra.mxu0 %v782
        %1599 = vmatpush.msra.mxu0 %v779
        %1600 = vmatpush.msra.mxu0 %v776
        %1601 = vmatpush.msra.mxu0 %v773
        %1602 = vmatpush.msra.mxu0 %v770
        %1603 = vmatpush.msra.mxu0 %v767
        %1604 = vmatpush.msra.mxu0 %v764
        %1605 = vmatpush.msra.mxu0 %v761
        %1606 = vmatpush.msra.mxu0 %v758
        %1607 = vmatpush.msra.mxu0 %v755
        %1608 = vmatpush.msra.mxu0 %v752
        %1609 = vmatpush.msra.mxu0 %v749
        %1610 = vmatmul.f32.gmra.mxu0 %v1583
        %v1611 = vpop.f32.mrf.mxu0
        %v1612 = vadd.f32 0.0, %v1611
        %1613 = vdwg.mxu0
        %1614 = vmatpush.msra.mxu0 %v795
        %1615 = vmatpush.msra.mxu0 %v792
        %1616 = vmatpush.msra.mxu0 %v789
        %1617 = vmatpush.msra.mxu0 %v786
        %1618 = vmatpush.msra.mxu0 %v783
        %1619 = vmatpush.msra.mxu0 %v780
        %1620 = vmatpush.msra.mxu0 %v777
        %1621 = vmatpush.msra.mxu0 %v774
        %1622 = vmatpush.msra.mxu0 %v771
        %1623 = vmatpush.msra.mxu0 %v768
        %1624 = vmatpush.msra.mxu0 %v765
        %1625 = vmatpush.msra.mxu0 %v762
        %1626 = vmatpush.msra.mxu0 %v759
        %1627 = vmatpush.msra.mxu0 %v756
        %1628 = vmatpush.msra.mxu0 %v753
        %1629 = vmatpush.msra.mxu0 %v750
        %1630 = vmatmul.f32.gmra.mxu0 %v1583
        %v1631 = vpop.f32.mrf.mxu0
        %v1632 = vadd.f32 0.0, %v1631
        %1633 = vdwg.mxu0
        %1634 = vmatpush.msra.mxu0 %v796
        %1635 = vmatpush.msra.mxu0 %v793
        %1636 = vmatpush.msra.mxu0 %v790
        %1637 = vmatpush.msra.mxu0 %v787
        %1638 = vmatpush.msra.mxu0 %v784
        %1639 = vmatpush.msra.mxu0 %v781
        %1640 = vmatpush.msra.mxu0 %v778
        %1641 = vmatpush.msra.mxu0 %v775
        %1642 = vmatpush.msra.mxu0 %v772
        %1643 = vmatpush.msra.mxu0 %v769
        %1644 = vmatpush.msra.mxu0 %v766
        %1645 = vmatpush.msra.mxu0 %v763
        %1646 = vmatpush.msra.mxu0 %v760
        %1647 = vmatpush.msra.mxu0 %v757
        %1648 = vmatpush.msra.mxu0 %v754
        %1649 = vmatpush.msra.mxu0 %v751
        %1650 = vmatmul.f32.gmra.mxu0 %v1583
        %v1651 = vpop.f32.mrf.mxu0
        %v1652 = vadd.f32 0.0, %v1651
        %1653 = vdwg.mxu0
        %1654 = vmatpush.msra.mxu0 %v842
        %1655 = vmatpush.msra.mxu0 %v839
        %1656 = vmatpush.msra.mxu0 %v836
        %1657 = vmatpush.msra.mxu0 %v833
        %1658 = vmatpush.msra.mxu0 %v830
        %1659 = vmatpush.msra.mxu0 %v827
        %1660 = vmatpush.msra.mxu0 %v824
        %1661 = vmatpush.msra.mxu0 %v821
        %1662 = vmatpush.msra.mxu0 %v818
        %1663 = vmatpush.msra.mxu0 %v815
        %1664 = vmatpush.msra.mxu0 %v812
        %1665 = vmatpush.msra.mxu0 %v809
        %1666 = vmatpush.msra.mxu0 %v806
        %1667 = vmatpush.msra.mxu0 %v803
        %1668 = vmatpush.msra.mxu0 %v800
        %1669 = vmatpush.msra.mxu0 %v797
        %1670 = vmatmul.f32.gmra.mxu0 %v1584
        %v1671 = vpop.f32.mrf.mxu0
        %v1672 = vadd.f32 0.0, %v1671
        %1673 = vdwg.mxu0
        %1674 = vmatpush.msra.mxu0 %v843
        %1675 = vmatpush.msra.mxu0 %v840
        %1676 = vmatpush.msra.mxu0 %v837
        %1677 = vmatpush.msra.mxu0 %v834
        %1678 = vmatpush.msra.mxu0 %v831
        %1679 = vmatpush.msra.mxu0 %v828
        %1680 = vmatpush.msra.mxu0 %v825
        %1681 = vmatpush.msra.mxu0 %v822
        %1682 = vmatpush.msra.mxu0 %v819
        %1683 = vmatpush.msra.mxu0 %v816
        %1684 = vmatpush.msra.mxu0 %v813
        %1685 = vmatpush.msra.mxu0 %v810
        %1686 = vmatpush.msra.mxu0 %v807
        %1687 = vmatpush.msra.mxu0 %v804
        %1688 = vmatpush.msra.mxu0 %v801
        %1689 = vmatpush.msra.mxu0 %v798
        %1690 = vmatmul.f32.gmra.mxu0 %v1584
        %v1691 = vpop.f32.mrf.mxu0
        %v1692 = vadd.f32 0.0, %v1691
        %1693 = vdwg.mxu0
        %1694 = vmatpush.msra.mxu0 %v844
        %1695 = vmatpush.msra.mxu0 %v841
        %1696 = vmatpush.msra.mxu0 %v838
        %1697 = vmatpush.msra.mxu0 %v835
        %1698 = vmatpush.msra.mxu0 %v832
        %1699 = vmatpush.msra.mxu0 %v829
        %1700 = vmatpush.msra.mxu0 %v826
        %1701 = vmatpush.msra.mxu0 %v823
        %1702 = vmatpush.msra.mxu0 %v820
        %1703 = vmatpush.msra.mxu0 %v817
        %1704 = vmatpush.msra.mxu0 %v814
        %1705 = vmatpush.msra.mxu0 %v811
        %1706 = vmatpush.msra.mxu0 %v808
        %1707 = vmatpush.msra.mxu0 %v805
        %1708 = vmatpush.msra.mxu0 %v802
        %1709 = vmatpush.msra.mxu0 %v799
        %1710 = vmatmul.f32.gmra.mxu0 %v1584
        %v1711 = vpop.f32.mrf.mxu0
        %v1712 = vadd.f32 0.0, %v1711
        %1713 = vdwg.mxu0
        %v1714 = vadd.f32 %v1588, %v1612
        %v1715 = vadd.f32 %v1589, %v1632
        %v1716 = vadd.f32 %v1591, %v1672
        %v1717 = vadd.f32 %v1592, %v1692
        %v1718 = vxor.u32 %v1714, 2147483648
        %v1719 = vxor.u32 %v1715, 2147483648
        %v1720 = vxor.u32 %v1716, 2147483648
        %v1721 = vxor.u32 %v1717, 2147483648
        %v1722 = vmul.f32 %v1718, 1.442695
        %v1723 = vpow.pop %v1722
        %v1724 = vmul.f32 %v1719, 1.442695
        %v1725 = vpow.pop %v1724
        %v1726 = vmul.f32 %v1720, 1.442695
        %v1727 = vpow.pop %v1726
        %v1728 = vmul.f32 %v1721, 1.442695
        %v1729 = vpow.pop %v1728
        %v1730 = vadd.f32 %v1723, 1.0
        %v1731 = vadd.f32 %v1725, 1.0
        %v1732 = vadd.f32 %v1727, 1.0
        %v1733 = vadd.f32 %v1729, 1.0
        %v1734 = vrcp.pop %v1730
        %v1735 = vmul.f32 %v1730, %v1734
        %v1736 = vsub.f32 1.0, %v1735
        %v1737 = vmul.f32 %v1734, %v1736
        %v1738 = vadd.f32 %v1734, %v1737
        %vm1739 = vweird.f32 %v1730
        %vm1740 = vweird.f32 %v1734
        %vm1741 = vmor %vm1739, %vm1740
        %v1742 = vsel %vm1741, %v1734, %v1738
        %v1743 = vand.u32 2147483647, %v1730
        %vm1744 = vcmp.eq.f32.partialorder %v1743, 8.507059e+37
        %v1745 = vand.u32 %v1730, 2147483648
        %v1746 = vor.u32 1.1754944e-38, %v1745
        %v1747 = vsel %vm1744, %v1746, %v1742
        %v1748 = vmul.f32 1.0, %v1747
        %v1749 = vrcp.pop %v1731
        %v1750 = vmul.f32 %v1731, %v1749
        %v1751 = vsub.f32 1.0, %v1750
        %v1752 = vmul.f32 %v1749, %v1751
        %v1753 = vadd.f32 %v1749, %v1752
        %vm1754 = vweird.f32 %v1731
        %vm1755 = vweird.f32 %v1749
        %vm1756 = vmor %vm1754, %vm1755
        %v1757 = vsel %vm1756, %v1749, %v1753
        %v1758 = vand.u32 2147483647, %v1731
        %vm1759 = vcmp.eq.f32.partialorder %v1758, 8.507059e+37
        %v1760 = vand.u32 %v1731, 2147483648
        %v1761 = vor.u32 1.1754944e-38, %v1760
        %v1762 = vsel %vm1759, %v1761, %v1757
        %v1763 = vmul.f32 1.0, %v1762
        %v1764 = vrcp.pop %v1732
        %v1765 = vmul.f32 %v1732, %v1764
        %v1766 = vsub.f32 1.0, %v1765
        %v1767 = vmul.f32 %v1764, %v1766
        %v1768 = vadd.f32 %v1764, %v1767
        %vm1769 = vweird.f32 %v1732
        %vm1770 = vweird.f32 %v1764
        %vm1771 = vmor %vm1769, %vm1770
        %v1772 = vsel %vm1771, %v1764, %v1768
        %v1773 = vand.u32 2147483647, %v1732
        %vm1774 = vcmp.eq.f32.partialorder %v1773, 8.507059e+37
        %v1775 = vand.u32 %v1732, 2147483648
        %v1776 = vor.u32 1.1754944e-38, %v1775
        %v1777 = vsel %vm1774, %v1776, %v1772
        %v1778 = vmul.f32 1.0, %v1777
        %v1779 = vrcp.pop %v1733
        %v1780 = vmul.f32 %v1733, %v1779
        %v1781 = vsub.f32 1.0, %v1780
        %v1782 = vmul.f32 %v1779, %v1781
        %v1783 = vadd.f32 %v1779, %v1782
        %vm1784 = vweird.f32 %v1733
        %vm1785 = vweird.f32 %v1779
        %vm1786 = vmor %vm1784, %vm1785
        %v1787 = vsel %vm1786, %v1779, %v1783
        %v1788 = vand.u32 2147483647, %v1733
        %vm1789 = vcmp.eq.f32.partialorder %v1788, 8.507059e+37
        %v1790 = vand.u32 %v1733, 2147483648
        %v1791 = vor.u32 1.1754944e-38, %v1790
        %v1792 = vsel %vm1789, %v1791, %v1787
        %v1793 = vmul.f32 1.0, %v1792
        %v1794 = vadd.f32 %v1652, %v1062
        %v1795 = vadd.f32 %v1712, %v1063
        %v1796 = vmul.f32 %v1748, %v1794
        %v1797 = vmul.f32 %v1778, %v1795
        %v1798 = vadd.f32 %v1590, %v1796
        %v1799 = vadd.f32 %v1593, %v1797
        %v1800 = vtanh.pop %v1798
        %v1801 = vtanh.pop %v1799
        %v1802 = vsub.f32 1.0, %v1763
        %v1803 = vsub.f32 1.0, %v1793
        %v1804 = vmul.f32 %v1802, %v1800
        %v1805 = vmul.f32 %v1803, %v1801
        %v1806 = vmul.f32 %v1763, %v1583
        %v1807 = vmul.f32 %v1793, %v1584
        %v1808 = vadd.f32 %v1804, %v1806
        %v1809 = vadd.f32 %v1805, %v1807
        %s1810 = sadd.s32 %s848, 3
        %v1811 = vstv %s1810
        %vm1812 = vcmp.lt.s32.totalorder %v1811, %v847
        %s1813 = ssub.s32 4, %s848
        %v1814 = vstv %s1813
        %vm1815 = vcmp.lt.s32.totalorder %v1814, %v847
        %v1816 = vsel %vm1812, 1, 0
        %v1817 = vsel %vm1815, 1, 0
        %1818 = vset.pattern.permute.xlu0 0
        %1819 = vperm.xlu0 %1818, %v1816
        %v1820 = vpop.permute.xlu0 %1819
        %1821 = vset.pattern.permute.xlu0 0
        %1822 = vperm.xlu0 %1821, %v1817
        %v1823 = vpop.permute.xlu0 %1822
        %vm1824 = vcmp.eq.s32.totalorder %v1820, 1
        %vm1825 = vcmp.eq.s32.totalorder %v1823, 1
        %v1826 = vsel %vm1824, %v1808, %v1583
        %v1827 = vsel %vm1825, %v1809, %v1584
        %1828 = vst [vmem:[#allocation5] sm:$0xff] %v1826
        %1829 = vst [vmem:[#allocation5 + $0x8] sm:$0xff] %v1827
        %p1830 = scmp.eq.s32.totalorder %s32, 1
        // Predicated region
        $region73: #{tpu_custom_call.1} parent=47 // pred_check
          %p1831 = pneg %p1830
        $region74: #{tpu_custom_call.1} parent=47 // pred_check_branch
          %1833 = sbr.rel (%p1831) target = $region76
        $region75: #{tpu_custom_call.1} parent=47 // pred_region
          %v1834 = vld [vmem:[#allocation5] sm:$0xff]
          %v1835 = vld [vmem:[#allocation5 + $0x8] sm:$0xff]
          %v1836 = vld [vmem:[#allocation12] sm:$0xff]
          %v1837 = vld [vmem:[#allocation12 + $0x8] sm:$0xff]
          %v1838 = vld [vmem:[#allocation12 + $0x10] sm:$0xff]
          %v1839 = vld [vmem:[#allocation12 + $0x18] sm:$0xff]
          %v1840 = vld [vmem:[#allocation12 + $0x20] sm:$0xff]
          %v1841 = vld [vmem:[#allocation12 + $0x28] sm:$0xff]
          %v1842 = vld [vmem:[#allocation12 + $0x30] sm:$0xff]
          %v1843 = vld [vmem:[#allocation12 + $0x38] sm:$0xff]
          %v1844 = vld [vmem:[#allocation12 + $0x40] sm:$0xff]
          %v1845 = vld [vmem:[#allocation12 + $0x48] sm:$0xff]
          %v1846 = vld [vmem:[#allocation12 + $0x50] sm:$0xff]
          %v1847 = vld [vmem:[#allocation12 + $0x58] sm:$0xff]
          %v1848 = vld [vmem:[#allocation12 + $0x60] sm:$0xff]
          %v1849 = vld [vmem:[#allocation12 + $0x68] sm:$0xff]
          %v1850 = vld [vmem:[#allocation12 + $0x70] sm:$0xff]
          %v1851 = vld [vmem:[#allocation12 + $0x78] sm:$0xff]
          %v1852 = vld [vmem:[#allocation12 + $0x80] sm:$0xff]
          %v1853 = vld [vmem:[#allocation12 + $0x88] sm:$0xff]
          %v1854 = vld [vmem:[#allocation12 + $0x90] sm:$0xff]
          %v1855 = vld [vmem:[#allocation12 + $0x98] sm:$0xff]
          %v1856 = vld [vmem:[#allocation12 + $0xa0] sm:$0xff]
          %v1857 = vld [vmem:[#allocation12 + $0xa8] sm:$0xff]
          %v1858 = vld [vmem:[#allocation12 + $0xb0] sm:$0xff]
          %v1859 = vld [vmem:[#allocation12 + $0xb8] sm:$0xff]
          %v1860 = vld [vmem:[#allocation12 + $0xc0] sm:$0xff]
          %v1861 = vld [vmem:[#allocation12 + $0xc8] sm:$0xff]
          %v1862 = vld [vmem:[#allocation12 + $0xd0] sm:$0xff]
          %v1863 = vld [vmem:[#allocation12 + $0xd8] sm:$0xff]
          %v1864 = vld [vmem:[#allocation12 + $0xe0] sm:$0xff]
          %v1865 = vld [vmem:[#allocation12 + $0xe8] sm:$0xff]
          %v1866 = vld [vmem:[#allocation12 + $0xf0] sm:$0xff]
          %v1867 = vld [vmem:[#allocation12 + $0xf8] sm:$0xff]
          %1868 = vmatpush.msra.mxu0 %v1867
          %1869 = vmatpush.msra.mxu0 %v1866
          %1870 = vmatpush.msra.mxu0 %v1865
          %1871 = vmatpush.msra.mxu0 %v1864
          %1872 = vmatpush.msra.mxu0 %v1863
          %1873 = vmatpush.msra.mxu0 %v1862
          %1874 = vmatpush.msra.mxu0 %v1861
          %1875 = vmatpush.msra.mxu0 %v1860
          %1876 = vmatpush.msra.mxu0 %v1859
          %1877 = vmatpush.msra.mxu0 %v1858
          %1878 = vmatpush.msra.mxu0 %v1857
          %1879 = vmatpush.msra.mxu0 %v1856
          %1880 = vmatpush.msra.mxu0 %v1855
          %1881 = vmatpush.msra.mxu0 %v1854
          %1882 = vmatpush.msra.mxu0 %v1853
          %1883 = vmatpush.msra.mxu0 %v1852
          %1884 = vmatmul.f32.gmra.mxu0 %v1835
          %v1885 = vpop.f32.mrf.mxu0
          %v1886 = vadd.f32 0.0, %v1885
          %1887 = vdwg.mxu0
          %1888 = vmatpush.msra.mxu0 %v1851
          %1889 = vmatpush.msra.mxu0 %v1850
          %1890 = vmatpush.msra.mxu0 %v1849
          %1891 = vmatpush.msra.mxu0 %v1848
          %1892 = vmatpush.msra.mxu0 %v1847
          %1893 = vmatpush.msra.mxu0 %v1846
          %1894 = vmatpush.msra.mxu0 %v1845
          %1895 = vmatpush.msra.mxu0 %v1844
          %1896 = vmatpush.msra.mxu0 %v1843
          %1897 = vmatpush.msra.mxu0 %v1842
          %1898 = vmatpush.msra.mxu0 %v1841
          %1899 = vmatpush.msra.mxu0 %v1840
          %1900 = vmatpush.msra.mxu0 %v1839
          %1901 = vmatpush.msra.mxu0 %v1838
          %1902 = vmatpush.msra.mxu0 %v1837
          %1903 = vmatpush.msra.mxu0 %v1836
          %1904 = vmatmul.f32.gmra.mxu0 %v1834
          %v1905 = vpop.f32.mrf.mxu0
          %v1906 = vadd.f32 %v1886, %v1905
          %1907 = vdwg.mxu0
          %v1908 = vld [vmem:[%s8] sm:$0x1]
          %v1910 = vperm.slane %v1908, 0
          %v1912 = vadd.f32 %v1906, %v1910
          %1913 = vst [vmem:[#allocation13] sm:$0xff] %v1912
        $region76: #{tpu_custom_call.1} parent=47 // pred_fallthru
          _
        // Predicated region
        $region77: #{tpu_custom_call.1} parent=47 // pred_check
          %p1914 = pneg %p223
        $region78: #{tpu_custom_call.1} parent=47 // pred_check_branch
          %1916 = sbr.rel (%p1914) target = $region80
        $region79: #{tpu_custom_call.1} parent=47 // pred_region
          %1918 = vsyncadd [#allocation9], 0
          %s1919 = smul.addr %s31, 8
          %s1920 = scalar_lea.hbm %s9, %s1919
          %s1922 = sshll.u32 [#allocation13], 4
          %s1923 = int_to_ptr.vmem [resolvable:$true] %s1922
          %s1924 = sshll.u32 %s1920, 4
          %s1925 = int_to_ptr.hbm [resolvable:$true] %s1924
          %1927 = dma.vmem_to_hbm [thread:$0]  %s1923, 128, %s1925, [#allocation9]
        $region80: #{tpu_custom_call.1} parent=47 // pred_fallthru
          _
        // Predicated region
        $region81: #{tpu_custom_call.1} parent=47 // pred_check
          %p1928 = pneg %p223
        $region82: #{tpu_custom_call.1} parent=47 // pred_check_branch
          %1930 = sbr.rel (%p1928) target = $region84
        $region83: #{tpu_custom_call.1} parent=47 // pred_region
          %1932 = dma.done [#allocation9], 128
        $region84: #{tpu_custom_call.1} parent=47 // pred_fallthru
          _
      $region48: #{tpu_custom_call.1} parent=5 // pred_fallthru
        _
      %p1933 = scmp.le.s32.totalorder 2, %s22
      // Predicated region
      $region85: #{tpu_custom_call.1} parent=5 // pred_check
        %p1934 = pneg %p1933
      $region86: #{tpu_custom_call.1} parent=5 // pred_check_branch
        %1936 = sbr.rel (%p1934) target = $region88
      $region87: #{tpu_custom_call.1} parent=5 // pred_region
        %s1937 = ssub.s32 %s22, 2
      $region88: #{tpu_custom_call.1} parent=5 // pred_fallthru
        _
    $region6: #{tpu_custom_call.1} parent=1 // loop_footer
      %s26 = sadd.s32 1, %s22
    $region7: #{tpu_custom_call.1} parent=1 // loop_footer_branch
      %21 = sbr.rel target = $region3
    $region8: #{tpu_custom_call.1} parent=1 // loop_exit
      _
    %1938 = vsyncpa [#allocation8], 1
    %s1939 = scalar_lea.sflag [#allocation8], 1
    %1940 = vsyncpa %s1939, 1
    %1941 = vsyncpa [#allocation11], 1
    %s1942 = scalar_lea.sflag [#allocation11], 1
    %1943 = vsyncpa %s1942, 1
    %1944 = vsyncpa [#allocation9], 1
    %s1945 = scalar_lea.sflag [#allocation9], 1
    %1946 = vsyncpa %s1945, 1
  %1947 = vsyncmov [#allocation6]
  %s1948 = vpop.sfrf %1947
  %p1949 = scmp.eq.s32.totalorder %s1948, 0
  %p1950 = pneg %p1949
  %1952 = shalt.err (%p1950)
  %s1953 = scalar_lea.sflag [#allocation6], 1
  %1954 = vsyncmov %s1953
  %s1955 = vpop.sfrf %1954
  %p1956 = scmp.eq.s32.totalorder %s1955, 0
  %p1957 = pneg %p1956
  %1959 = shalt.err (%p1957)

</llo_original>
